<compile_context>
chip_gen: v5e
topology: v5e:2x2
jax: 0.10.0
libtpu: 0.0.40
codegen_flags: <defaults>
</compile_context>

<pallas_src>
import functools

import jax
import jax.numpy as jnp
from jax.experimental import pallas as pl
from jax.experimental.pallas import tpu as pltpu

LANE = 128


def _round_up(v, m):
    return (v + m - 1) // m * m


def _pad2d(a, rows, cols):
    r, c = a.shape
    return jnp.pad(a, ((0, rows - r), (0, cols - c)))


def convn_kernel(a_ref, x_ref, w_ref, b_ref, fw1_ref,
                 fb1_ref, fw2_ref, fb2_ref, fw3_ref, fb3_ref,
                 o_ref,
                 h_ref, hw_ref, p_ref, z_ref,
                 *, tm, n_real):
    f32 = jnp.float32
    l = pl.program_id(0)            # GCN layer index (0..2), outer / sequential
    i = pl.program_id(1)            # node-row tile index, inner / sequential
    nt = pl.num_programs(1)

    @pl.when(jnp.logical_and(l == 0, i == 0))
    def _init():
        # Layer 0's H_prev is the (padded, bf16) node-feature matrix.
        h_ref[...] = x_ref[...]
        z_ref[...] = jnp.zeros_like(z_ref)

    @pl.when(i == 0)
    def _layer_start():
        # H_prev @ W_l once per layer (f32 accumulate on the MXU, stored bf16).
        hw = jnp.dot(h_ref[...], w_ref[0], preferred_element_type=f32)
        hw_ref[...] = hw.astype(hw_ref.dtype)
        p_ref[...] = jnp.zeros_like(p_ref)

    # Aggregation for this row tile:  A_tile (TM, N_pad) @ HW (N_pad, C_pad), f32 acc.
    rows = jnp.dot(a_ref[...], hw_ref[...], preferred_element_type=f32)
    rows = jnp.maximum(rows + b_ref[0], 0.0)            # bias + ReLU in f32 (VPU)

    # Mask padded node rows: A row is zero there, but relu(0 + b) != 0 would pollute
    # both the sum-pool and (harmlessly) the next layer's activations.
    row_ids = i * tm + jax.lax.broadcasted_iota(jnp.int32, (tm, 1), 0)
    rows = jnp.where(row_ids < n_real, rows, 0.0)

    # This layer's activations become H_prev for the next layer (HW already captured
    # the old H_prev, so overwriting in place is safe).
    start = pl.multiple_of(i * tm, tm)
    h_ref[pl.ds(start, tm), :] = rows.astype(h_ref.dtype)

    # Fold the global sum-pool into the tile loop.
    p_ref[...] += jnp.sum(rows, axis=0, keepdims=True)

    @pl.when(i == nt - 1)
    def _layer_end():
        # torch.cat([x1,x2,x3],1) @ fc1.W^T  ==  sum_l pool_l @ fc1_rowblock_l
        z_ref[...] += jnp.dot(p_ref[...], fw1_ref[0], preferred_element_type=f32)

    @pl.when(jnp.logical_and(l == 2, i == nt - 1))
    def _head():
        z = jnp.maximum(z_ref[...] + fb1_ref[...], 0.0)                       # relu(fc1)
        z = jnp.maximum(
            jnp.dot(z, fw2_ref[...], preferred_element_type=f32) + fb2_ref[...], 0.0)
        o_ref[...] = (jnp.dot(z, fw3_ref[...], preferred_element_type=f32)
                      + fb3_ref[...])                                          # fc3 logits


def gcn_norm_dense(edge_index, num_nodes):
    """PyG gcn_norm (improved=False, self-loops) as a dense matrix A_hat[dst, src]."""
    src, dst = edge_index[0], edge_index[1]
    self_idx = jnp.arange(num_nodes, dtype=src.dtype)
    src = jnp.concatenate([src, self_idx])
    dst = jnp.concatenate([dst, self_idx])
    deg = jnp.zeros((num_nodes,), jnp.float32).at[dst].add(1.0)
    dinv = jnp.where(deg > 0, deg ** -0.5, 0.0)
    norm = dinv[src] * dinv[dst]
    a_hat = jnp.zeros((num_nodes, num_nodes), jnp.float32).at[dst, src].add(norm)
    return a_hat


def convn_forward(x, edge_index, params):
    n, f = x.shape
    conv_dim = params["w1"].shape[1]
    num_classes = params["fw3"].shape[1]

    # --- padded sizes (lane-dense everywhere) ---
    c_pad = _round_up(max(conv_dim, f), LANE)          # shared F/C pad so GCN weights stack
    h1_pad = _round_up(params["fw1"].shape[1], LANE)   # fc1 out (=128 already)
    h2_pad = _round_up(params["fw2"].shape[1], LANE)   # fc2 out (64 -> 128)
    nc_pad = _round_up(num_classes, LANE)

    # --- row-tile size: biggest TM that keeps double-buffered A tiles + resident
    #     activations under ~40 MiB (safe under v7x's 64 MiB physical / 48 MiB scoped) ---
    tm = 128
    n_pad = _round_up(max(n, tm), tm)
    resident = 4 * n_pad * c_pad * 2                   # x + h + hw scratch (bf16), ~2x slack
    for cand in (512, 256):
        if n_pad % cand == 0 and resident + 2 * cand * n_pad * 2 <= 40 * 1024 * 1024:
            tm = cand
            break
    n_tiles = n_pad // tm

    # --- build / pad operands (bf16 on the A@HW path, f32 biases + head) ---
    a_hat = gcn_norm_dense(edge_index, n)
    a_pad = (jnp.zeros((n_pad, n_pad), jnp.float32).at[:n, :n].set(a_hat)
             ).astype(jnp.bfloat16)
    x_pad = (jnp.zeros((n_pad, c_pad), jnp.float32).at[:n, :f].set(x)
             ).astype(jnp.bfloat16)

    w_stack = jnp.stack([_pad2d(params["w1"], c_pad, c_pad),
                         _pad2d(params["w2"], c_pad, c_pad),
                         _pad2d(params["w3"], c_pad, c_pad)]).astype(jnp.bfloat16)
    b_stack = jnp.stack([_pad2d(params["b1"], 1, c_pad),
                         _pad2d(params["b2"], 1, c_pad),
                         _pad2d(params["b3"], 1, c_pad)]).astype(jnp.float32)

    fw1 = params["fw1"]                                # (3*conv_dim, 128), split per layer
    fw1_stack = jnp.stack([
        _pad2d(fw1[0 * conv_dim:1 * conv_dim], c_pad, h1_pad),
        _pad2d(fw1[1 * conv_dim:2 * conv_dim], c_pad, h1_pad),
        _pad2d(fw1[2 * conv_dim:3 * conv_dim], c_pad, h1_pad)]).astype(jnp.float32)
    fb1 = _pad2d(params["fb1"], 1, h1_pad).astype(jnp.float32)
    fw2 = _pad2d(params["fw2"], h1_pad, h2_pad).astype(jnp.float32)
    fb2 = _pad2d(params["fb2"], 1, h2_pad).astype(jnp.float32)
    fw3 = _pad2d(params["fw3"], h2_pad, nc_pad).astype(jnp.float32)
    fb3 = _pad2d(params["fb3"], 1, nc_pad).astype(jnp.float32)

    def _full(shape):
        return pl.BlockSpec(shape, lambda l, i: (0,) * len(shape))

    in_specs = [
        pl.BlockSpec((tm, n_pad), lambda l, i: (i, 0)),            # A_hat row tiles
        _full((n_pad, c_pad)),                                     # x (resident)
        pl.BlockSpec((1, c_pad, c_pad), lambda l, i: (l, 0, 0)),   # W_l (streamed per layer)
        pl.BlockSpec((1, 1, c_pad), lambda l, i: (l, 0, 0)),       # b_l
        pl.BlockSpec((1, c_pad, h1_pad), lambda l, i: (l, 0, 0)),  # fc1 row block for layer l
        _full((1, h1_pad)), _full((h1_pad, h2_pad)), _full((1, h2_pad)),
        _full((h2_pad, nc_pad)), _full((1, nc_pad)),
    ]
    out_spec = pl.BlockSpec((1, nc_pad), lambda l, i: (0, 0))
    scratch = [
        pltpu.VMEM((n_pad, c_pad), jnp.bfloat16),   # h: activations, reused across layers
        pltpu.VMEM((n_pad, c_pad), jnp.bfloat16),   # hw: H_prev @ W_l
        pltpu.VMEM((1, c_pad), jnp.float32),        # per-layer pooled sum
        pltpu.VMEM((1, h1_pad), jnp.float32),       # fc1 pre-activation accumulator
    ]

    flops = (3 * (2 * n_pad * n_pad * c_pad + 2 * n_pad * c_pad * c_pad)
             + 2 * (3 * c_pad * h1_pad + h1_pad * h2_pad + h2_pad * nc_pad))
    bytes_accessed = (3 * n_pad * n_pad * 2 + n_pad * c_pad * 2
                      + w_stack.size * 2 + b_stack.size * 4 + fw1_stack.size * 4
                      + fw2.size * 4 + fw3.size * 4 + 4 * nc_pad)
    cost = pl.CostEstimate(flops=int(flops), transcendentals=0,
                           bytes_accessed=int(bytes_accessed))

    kernel = functools.partial(convn_kernel, tm=tm, n_real=n)
    out = pl.pallas_call(
        kernel,
        out_shape=jax.ShapeDtypeStruct((1, nc_pad), jnp.float32),
        grid_spec=pltpu.PrefetchScalarGridSpec(
            num_scalar_prefetch=0,
            grid=(3, n_tiles),
            in_specs=in_specs,
            out_specs=out_spec,
            scratch_shapes=scratch),
        compiler_params=pltpu.CompilerParams(
            # Both axes carry sequential deps (layer chain, shared pool/activation scratch).
            # TODO(synk): for v7x megacore, split row tiles across cores with per-core
            # partial pool accumulators instead of shared scratch.
            dimension_semantics=("arbitrary", "arbitrary"),
            vmem_limit_bytes=48 * 1024 * 1024),
        cost_estimate=cost,
    )(a_pad, x_pad, w_stack, b_stack, fw1_stack, fb1, fw2, fb2, fw3, fb3)

    return out[0, :num_classes]   # matches torch: torch.sum(x, 0) makes the output 1-D


def convn_reference(x, edge_index, params):
    """Pure-JAX f32 reference of the inference forward path."""
    a = gcn_norm_dense(edge_index, x.shape[0])
    h1 = jnp.maximum(a @ (x @ params["w1"]) + params["b1"], 0.0)
    h2 = jnp.maximum(a @ (h1 @ params["w2"]) + params["b2"], 0.0)
    h3 = jnp.maximum(a @ (h2 @ params["w3"]) + params["b3"], 0.0)
    pooled = jnp.sum(jnp.concatenate([h1, h2, h3], axis=1), axis=0)
    z = jnp.maximum(pooled @ params["fw1"] + params["fb1"][0], 0.0)
    z = jnp.maximum(z @ params["fw2"] + params["fb2"][0], 0.0)
    return z @ params["fw3"] + params["fb3"][0]


def init_params(key, num_features, conv_dim, num_classes):
    ks = jax.random.split(key, 12)
    s = 0.1

    def w(k, shape):
        return (s * jax.random.normal(k, shape)).astype(jnp.float32)

    return {
        # GCN weights stored (in, out); biases kept 2-D (1, out).
        "w1": w(ks[0], (num_features, conv_dim)), "b1": w(ks[1], (1, conv_dim)),
        "w2": w(ks[2], (conv_dim, conv_dim)),     "b2": w(ks[3], (1, conv_dim)),
        "w3": w(ks[4], (conv_dim, conv_dim)),     "b3": w(ks[5], (1, conv_dim)),
        "fw1": w(ks[6], (3 * conv_dim, 128)),     "fb1": w(ks[7], (1, 128)),
        "fw2": w(ks[8], (128, 64)),               "fb2": w(ks[9], (1, 64)),
        "fw3": w(ks[10], (64, num_classes)),      "fb3": w(ks[11], (1, num_classes)),
    }


if __name__ == "__main__":
    num_nodes = 16
    num_features = 8
    conv_dim = 16
    num_classes = 4

    key = jax.random.PRNGKey(0)
    k_x, k_p = jax.random.split(key)

    # Node features (N, F)
    x = jax.random.normal(k_x, (num_nodes, num_features), dtype=jnp.float32)

    # Undirected ring graph, both edge directions (typical PyG edge_index).
    i = jnp.arange(num_nodes, dtype=jnp.int32)
    j = (i + 1) % num_nodes
    edge_index = jnp.stack(
        [jnp.concatenate([i, j]), jnp.concatenate([j, i])], axis=0)  # (2, 2N)

    params = init_params(k_p, num_features, conv_dim, num_classes)

    out = convn_forward(x, edge_index, params)
    jax.block_until_ready(out)
    assert out.shape == (num_classes,)

    # bf16 A@HW path vs f32 reference: loose tolerance.
    ref = convn_reference(x, edge_index, params)
    assert float(jnp.max(jnp.abs(out - ref))) < 0.25, (out, ref)

    print("KERNEL_OK")
</pallas_src>

<mosaic_0001>
module attributes {stable_mosaic.version = 11 : i64} {
  func.func @convn_kernel(%arg0: i32, %arg1: i32, %arg2: memref<128x128xbf16, #tpu.memory_space<vmem>>, %arg3: memref<128x128xbf16, #tpu.memory_space<vmem>>, %arg4: memref<1x128x128xbf16, #tpu.memory_space<vmem>>, %arg5: memref<1x1x128xf32, #tpu.memory_space<vmem>>, %arg6: memref<1x128x128xf32, #tpu.memory_space<vmem>>, %arg7: memref<1x128xf32, #tpu.memory_space<vmem>>, %arg8: memref<128x128xf32, #tpu.memory_space<vmem>>, %arg9: memref<1x128xf32, #tpu.memory_space<vmem>>, %arg10: memref<128x128xf32, #tpu.memory_space<vmem>>, %arg11: memref<1x128xf32, #tpu.memory_space<vmem>>, %arg12: memref<1x128xf32, #tpu.memory_space<vmem>>, %arg13: memref<128x128xbf16, #tpu.memory_space<vmem>>, %arg14: memref<128x128xbf16, #tpu.memory_space<vmem>>, %arg15: memref<1x128xf32, #tpu.memory_space<vmem>>, %arg16: memref<1x128xf32, #tpu.memory_space<vmem>>) attributes {dimension_semantics = [#tpu.dimension_semantics<arbitrary>, #tpu.dimension_semantics<arbitrary>], iteration_bounds = array<i64: 3, 1>, scalar_prefetch = 0 : i64, scratch_operands = 4 : i64, tpu.core_type = #tpu.core_type<tc>, window_params = [{transform_indices = @transform_0, window_bounds = array<i64: 128, 128>}, {pipeline_mode = #tpu.pipeline_mode<synchronous>, transform_indices = @transform_1, window_bounds = array<i64: 128, 128>}, {transform_indices = @transform_2, window_bounds = array<i64: 1, 128, 128>}, {transform_indices = @transform_3, window_bounds = array<i64: 1, 1, 128>}, {transform_indices = @transform_4, window_bounds = array<i64: 1, 128, 128>}, {pipeline_mode = #tpu.pipeline_mode<synchronous>, transform_indices = @transform_5, window_bounds = array<i64: 1, 128>}, {pipeline_mode = #tpu.pipeline_mode<synchronous>, transform_indices = @transform_6, window_bounds = array<i64: 128, 128>}, {pipeline_mode = #tpu.pipeline_mode<synchronous>, transform_indices = @transform_7, window_bounds = array<i64: 1, 128>}, {pipeline_mode = #tpu.pipeline_mode<synchronous>, transform_indices = @transform_8, window_bounds = array<i64: 128, 128>}, {pipeline_mode = #tpu.pipeline_mode<synchronous>, transform_indices = @transform_9, window_bounds = array<i64: 1, 128>}, {pipeline_mode = #tpu.pipeline_mode<synchronous>, transform_indices = @transform_10, window_bounds = array<i64: 1, 128>}]} {
    %c0_i32 = arith.constant 0 : i32
    %0 = arith.cmpi eq, %arg0, %c0_i32 : i32
    %c0_i32_0 = arith.constant 0 : i32
    %1 = arith.cmpi eq, %arg1, %c0_i32_0 : i32
    %2 = arith.andi %0, %1 : i1
    %3 = arith.extui %2 : i1 to i32
    %c0_i32_1 = arith.constant 0 : i32
    %4 = arith.cmpi ne, %3, %c0_i32_1 : i32
    scf.if %4 {
      %c0_23 = arith.constant 0 : index
      %c0_24 = arith.constant 0 : index
      %45 = vector.load %arg3[%c0_23, %c0_24] : memref<128x128xbf16, #tpu.memory_space<vmem>>, vector<128x128xbf16>
      %c0_25 = arith.constant 0 : index
      %c0_26 = arith.constant 0 : index
      %46 = vector.load %arg13[%c0_25, %c0_26] : memref<128x128xbf16, #tpu.memory_space<vmem>>, vector<128x128xbf16>
      tpu.vector_store %arg13[%c0_25, %c0_26], %45 {strides = array<i32>} : memref<128x128xbf16, #tpu.memory_space<vmem>>, vector<128x128xbf16>,
      %cst_27 = arith.constant 0.000000e+00 : f32
      %47 = vector.broadcast %cst_27 : f32 to vector<1x128xf32>
      %c0_28 = arith.constant 0 : index
      %c0_29 = arith.constant 0 : index
      %48 = vector.load %arg16[%c0_28, %c0_29] : memref<1x128xf32, #tpu.memory_space<vmem>>, vector<1x128xf32>
      tpu.vector_store %arg16[%c0_28, %c0_29], %47 {strides = array<i32>} : memref<1x128xf32, #tpu.memory_space<vmem>>, vector<1x128xf32>,
    } else {
    }
    %c0_i32_2 = arith.constant 0 : i32
    %5 = arith.cmpi eq, %arg1, %c0_i32_2 : i32
    %6 = arith.extui %5 : i1 to i32
    %c0_i32_3 = arith.constant 0 : i32
    %7 = arith.cmpi ne, %6, %c0_i32_3 : i32
    scf.if %7 {
      %c0_23 = arith.constant 0 : index
      %c0_24 = arith.constant 0 : index
      %45 = vector.load %arg13[%c0_23, %c0_24] : memref<128x128xbf16, #tpu.memory_space<vmem>>, vector<128x128xbf16>
      %c0_25 = arith.constant 0 : index
      %c0_26 = arith.constant 0 : index
      %c0_27 = arith.constant 0 : index
      %46 = vector.load %arg4[%c0_25, %c0_26, %c0_27] : memref<1x128x128xbf16, #tpu.memory_space<vmem>>, vector<1x128x128xbf16>
      %47 = vector.shape_cast %46 : vector<1x128x128xbf16> to vector<128x128xbf16>
      %cst_28 = arith.constant dense<0.000000e+00> : vector<128x128xf32>
      %48 = tpu.matmul %45, %47, %cst_28 {dimension_numbers = #tpu.dot_dimension_numbers<[1], [0], [0], [1], [0, 0, 1, 1], [], []>} : vector<128x128xbf16>, vector<128x128xbf16>, vector<128x128xf32> -> vector<128x128xf32>
      %49 = arith.truncf %48 : vector<128x128xf32> to vector<128x128xbf16>
      %c0_29 = arith.constant 0 : index
      %c0_30 = arith.constant 0 : index
      %50 = vector.load %arg14[%c0_29, %c0_30] : memref<128x128xbf16, #tpu.memory_space<vmem>>, vector<128x128xbf16>
      tpu.vector_store %arg14[%c0_29, %c0_30], %49 {strides = array<i32>} : memref<128x128xbf16, #tpu.memory_space<vmem>>, vector<128x128xbf16>,
      %cst_31 = arith.constant 0.000000e+00 : f32
      %51 = vector.broadcast %cst_31 : f32 to vector<1x128xf32>
      %c0_32 = arith.constant 0 : index
      %c0_33 = arith.constant 0 : index
      %52 = vector.load %arg15[%c0_32, %c0_33] : memref<1x128xf32, #tpu.memory_space<vmem>>, vector<1x128xf32>
      tpu.vector_store %arg15[%c0_32, %c0_33], %51 {strides = array<i32>} : memref<1x128xf32, #tpu.memory_space<vmem>>, vector<1x128xf32>,
    } else {
    }
    %c0 = arith.constant 0 : index
    %c0_4 = arith.constant 0 : index
    %8 = vector.load %arg2[%c0, %c0_4] : memref<128x128xbf16, #tpu.memory_space<vmem>>, vector<128x128xbf16>
    %c0_5 = arith.constant 0 : index
    %c0_6 = arith.constant 0 : index
    %9 = vector.load %arg14[%c0_5, %c0_6] : memref<128x128xbf16, #tpu.memory_space<vmem>>, vector<128x128xbf16>
    %cst = arith.constant dense<0.000000e+00> : vector<128x128xf32>
    %10 = tpu.matmul %8, %9, %cst {dimension_numbers = #tpu.dot_dimension_numbers<[1], [0], [0], [1], [0, 0, 1, 1], [], []>} : vector<128x128xbf16>, vector<128x128xbf16>, vector<128x128xf32> -> vector<128x128xf32>
    %c0_7 = arith.constant 0 : index
    %c0_8 = arith.constant 0 : index
    %c0_9 = arith.constant 0 : index
    %11 = vector.load %arg5[%c0_7, %c0_8, %c0_9] : memref<1x1x128xf32, #tpu.memory_space<vmem>>, vector<1x1x128xf32>
    %12 = vector.shape_cast %11 : vector<1x1x128xf32> to vector<1x128xf32>
    %13 = vector.broadcast %12 : vector<1x128xf32> to vector<128x128xf32>
    %14 = arith.addf %10, %13 : vector<128x128xf32>
    %cst_10 = arith.constant 0.000000e+00 : f32
    %15 = vector.broadcast %cst_10 : f32 to vector<128x128xf32>
    %16 = arith.maximumf %14, %15 : vector<128x128xf32>
    %c128_i32 = arith.constant 128 : i32
    %17 = arith.muli %arg1, %c128_i32 : i32
    %18 = tpu.iota {dimensions = array<i32: 0>} : vector<128x1xi32>
    %19 = vector.broadcast %17 : i32 to vector<128x1xi32>
    %20 = arith.addi %19, %18 : vector<128x1xi32>
    %c16_i32 = arith.constant 16 : i32
    %21 = vector.broadcast %c16_i32 : i32 to vector<128x1xi32>
    %22 = arith.cmpi slt, %20, %21 : vector<128x1xi32>
    %cst_11 = arith.constant 0.000000e+00 : f32
    %23 = vector.shape_cast %22 : vector<128x1xi1> to vector<128x1xi1>
    %24 = vector.broadcast %23 : vector<128x1xi1> to vector<128x128xi1>
    %25 = vector.broadcast %cst_11 : f32 to vector<128x128xf32>
    %26 = arith.select %24, %16, %25 : vector<128x128xi1>, vector<128x128xf32>
    %c128_i32_12 = arith.constant 128 : i32
    %27 = arith.muli %arg1, %c128_i32_12 : i32
    %28 = tpu.assume_multiple %27, 128 : i32
    %29 = arith.truncf %26 : vector<128x128xf32> to vector<128x128xbf16>
    %30 = arith.index_cast %28 : i32 to index
    %c0_13 = arith.constant 0 : index
    %31 = vector.load %arg13[%30, %c0_13] : memref<128x128xbf16, #tpu.memory_space<vmem>>, vector<128x128xbf16>
    tpu.vector_store %arg13[%30, %c0_13], %29 {strides = array<i32>} : memref<128x128xbf16, #tpu.memory_space<vmem>>, vector<128x128xbf16>,
    %c0_14 = arith.constant 0 : index
    %c0_15 = arith.constant 0 : index
    %32 = vector.load %arg15[%c0_14, %c0_15] : memref<1x128xf32, #tpu.memory_space<vmem>>, vector<1x128xf32>
    %cst_16 = arith.constant dense<0.000000e+00> : vector<128xf32>
    %33 = vector.multi_reduction <add>, %26, %cst_16 [0] : vector<128x128xf32> to vector<128xf32>
    %34 = vector.shape_cast %33 : vector<128xf32> to vector<1x128xf32>
    %35 = arith.addf %32, %34 : vector<1x128xf32>
    %c0_17 = arith.constant 0 : index
    %c0_18 = arith.constant 0 : index
    %36 = vector.load %arg15[%c0_17, %c0_18] : memref<1x128xf32, #tpu.memory_space<vmem>>, vector<1x128xf32>
    tpu.vector_store %arg15[%c0_17, %c0_18], %35 {strides = array<i32>} : memref<1x128xf32, #tpu.memory_space<vmem>>, vector<1x128xf32>,
    %c0_i32_19 = arith.constant 0 : i32
    %37 = arith.cmpi eq, %arg1, %c0_i32_19 : i32
    %38 = arith.extui %37 : i1 to i32
    %c0_i32_20 = arith.constant 0 : i32
    %39 = arith.cmpi ne, %38, %c0_i32_20 : i32
    scf.if %39 {
      %c0_23 = arith.constant 0 : index
      %c0_24 = arith.constant 0 : index
      %45 = vector.load %arg16[%c0_23, %c0_24] : memref<1x128xf32, #tpu.memory_space<vmem>>, vector<1x128xf32>
      %c0_25 = arith.constant 0 : index
      %c0_26 = arith.constant 0 : index
      %46 = vector.load %arg15[%c0_25, %c0_26] : memref<1x128xf32, #tpu.memory_space<vmem>>, vector<1x128xf32>
      %c0_27 = arith.constant 0 : index
      %c0_28 = arith.constant 0 : index
      %c0_29 = arith.constant 0 : index
      %47 = vector.load %arg6[%c0_27, %c0_28, %c0_29] : memref<1x128x128xf32, #tpu.memory_space<vmem>>, vector<1x128x128xf32>
      %48 = vector.shape_cast %47 : vector<1x128x128xf32> to vector<128x128xf32>
      %cst_30 = arith.constant dense<0.000000e+00> : vector<1x128xf32>
      %49 = tpu.matmul %46, %48, %cst_30 {dimension_numbers = #tpu.dot_dimension_numbers<[1], [0], [0], [1], [0, 0, 1, 1], [], []>} : vector<1x128xf32>, vector<128x128xf32>, vector<1x128xf32> -> vector<1x128xf32>
      %50 = arith.addf %45, %49 : vector<1x128xf32>
      %c0_31 = arith.constant 0 : index
      %c0_32 = arith.constant 0 : index
      %51 = vector.load %arg16[%c0_31, %c0_32] : memref<1x128xf32, #tpu.memory_space<vmem>>, vector<1x128xf32>
      tpu.vector_store %arg16[%c0_31, %c0_32], %50 {strides = array<i32>} : memref<1x128xf32, #tpu.memory_space<vmem>>, vector<1x128xf32>,
    } else {
    }
    %c2_i32 = arith.constant 2 : i32
    %40 = arith.cmpi eq, %arg0, %c2_i32 : i32
    %c0_i32_21 = arith.constant 0 : i32
    %41 = arith.cmpi eq, %arg1, %c0_i32_21 : i32
    %42 = arith.andi %40, %41 : i1
    %43 = arith.extui %42 : i1 to i32
    %c0_i32_22 = arith.constant 0 : i32
    %44 = arith.cmpi ne, %43, %c0_i32_22 : i32
    scf.if %44 {
      %c0_23 = arith.constant 0 : index
      %c0_24 = arith.constant 0 : index
      %45 = vector.load %arg16[%c0_23, %c0_24] : memref<1x128xf32, #tpu.memory_space<vmem>>, vector<1x128xf32>
      %c0_25 = arith.constant 0 : index
      %c0_26 = arith.constant 0 : index
      %46 = vector.load %arg7[%c0_25, %c0_26] : memref<1x128xf32, #tpu.memory_space<vmem>>, vector<1x128xf32>
      %47 = arith.addf %45, %46 : vector<1x128xf32>
      %cst_27 = arith.constant 0.000000e+00 : f32
      %48 = vector.broadcast %cst_27 : f32 to vector<1x128xf32>
      %49 = arith.maximumf %47, %48 : vector<1x128xf32>
      %c0_28 = arith.constant 0 : index
      %c0_29 = arith.constant 0 : index
      %50 = vector.load %arg8[%c0_28, %c0_29] : memref<128x128xf32, #tpu.memory_space<vmem>>, vector<128x128xf32>
      %cst_30 = arith.constant dense<0.000000e+00> : vector<1x128xf32>
      %51 = tpu.matmul %49, %50, %cst_30 {dimension_numbers = #tpu.dot_dimension_numbers<[1], [0], [0], [1], [0, 0, 1, 1], [], []>} : vector<1x128xf32>, vector<128x128xf32>, vector<1x128xf32> -> vector<1x128xf32>
      %c0_31 = arith.constant 0 : index
      %c0_32 = arith.constant 0 : index
      %52 = vector.load %arg9[%c0_31, %c0_32] : memref<1x128xf32, #tpu.memory_space<vmem>>, vector<1x128xf32>
      %53 = arith.addf %51, %52 : vector<1x128xf32>
      %cst_33 = arith.constant 0.000000e+00 : f32
      %54 = vector.broadcast %cst_33 : f32 to vector<1x128xf32>
      %55 = arith.maximumf %53, %54 : vector<1x128xf32>
      %c0_34 = arith.constant 0 : index
      %c0_35 = arith.constant 0 : index
      %56 = vector.load %arg10[%c0_34, %c0_35] : memref<128x128xf32, #tpu.memory_space<vmem>>, vector<128x128xf32>
      %cst_36 = arith.constant dense<0.000000e+00> : vector<1x128xf32>
      %57 = tpu.matmul %55, %56, %cst_36 {dimension_numbers = #tpu.dot_dimension_numbers<[1], [0], [0], [1], [0, 0, 1, 1], [], []>} : vector<1x128xf32>, vector<128x128xf32>, vector<1x128xf32> -> vector<1x128xf32>
      %c0_37 = arith.constant 0 : index
      %c0_38 = arith.constant 0 : index
      %58 = vector.load %arg11[%c0_37, %c0_38] : memref<1x128xf32, #tpu.memory_space<vmem>>, vector<1x128xf32>
      %59 = arith.addf %57, %58 : vector<1x128xf32>
      %c0_39 = arith.constant 0 : index
      %c0_40 = arith.constant 0 : index
      %60 = vector.load %arg12[%c0_39, %c0_40] : memref<1x128xf32, #tpu.memory_space<vmem>>, vector<1x128xf32>
      tpu.vector_store %arg12[%c0_39, %c0_40], %59 {strides = array<i32>} : memref<1x128xf32, #tpu.memory_space<vmem>>, vector<1x128xf32>,
    } else {
    }
    return
  }
  func.func @transform_0(%arg0: i32, %arg1: i32) -> (i32, i32) {
    %c0_i32 = arith.constant 0 : i32
    %c0_i32_0 = arith.constant 0 : i32
    return %arg1, %c0_i32 : i32, i32
  }
  func.func @transform_1(%arg0: i32, %arg1: i32) -> (i32, i32) {
    %c0_i32 = arith.constant 0 : i32
    %c0_i32_0 = arith.constant 0 : i32
    %c0_i32_1 = arith.constant 0 : i32
    return %c0_i32, %c0_i32_0 : i32, i32
  }
  func.func @transform_2(%arg0: i32, %arg1: i32) -> (i32, i32, i32) {
    %c0_i32 = arith.constant 0 : i32
    %c0_i32_0 = arith.constant 0 : i32
    %c0_i32_1 = arith.constant 0 : i32
    return %arg0, %c0_i32, %c0_i32_0 : i32, i32, i32
  }
  func.func @transform_3(%arg0: i32, %arg1: i32) -> (i32, i32, i32) {
    %c0_i32 = arith.constant 0 : i32
    %c0_i32_0 = arith.constant 0 : i32
    %c0_i32_1 = arith.constant 0 : i32
    return %arg0, %c0_i32, %c0_i32_0 : i32, i32, i32
  }
  func.func @transform_4(%arg0: i32, %arg1: i32) -> (i32, i32, i32) {
    %c0_i32 = arith.constant 0 : i32
    %c0_i32_0 = arith.constant 0 : i32
    %c0_i32_1 = arith.constant 0 : i32
    return %arg0, %c0_i32, %c0_i32_0 : i32, i32, i32
  }
  func.func @transform_5(%arg0: i32, %arg1: i32) -> (i32, i32) {
    %c0_i32 = arith.constant 0 : i32
    %c0_i32_0 = arith.constant 0 : i32
    %c0_i32_1 = arith.constant 0 : i32
    return %c0_i32, %c0_i32_0 : i32, i32
  }
  func.func @transform_6(%arg0: i32, %arg1: i32) -> (i32, i32) {
    %c0_i32 = arith.constant 0 : i32
    %c0_i32_0 = arith.constant 0 : i32
    %c0_i32_1 = arith.constant 0 : i32
    return %c0_i32, %c0_i32_0 : i32, i32
  }
  func.func @transform_7(%arg0: i32, %arg1: i32) -> (i32, i32) {
    %c0_i32 = arith.constant 0 : i32
    %c0_i32_0 = arith.constant 0 : i32
    %c0_i32_1 = arith.constant 0 : i32
    return %c0_i32, %c0_i32_0 : i32, i32
  }
  func.func @transform_8(%arg0: i32, %arg1: i32) -> (i32, i32) {
    %c0_i32 = arith.constant 0 : i32
    %c0_i32_0 = arith.constant 0 : i32
    %c0_i32_1 = arith.constant 0 : i32
    return %c0_i32, %c0_i32_0 : i32, i32
  }
  func.func @transform_9(%arg0: i32, %arg1: i32) -> (i32, i32) {
    %c0_i32 = arith.constant 0 : i32
    %c0_i32_0 = arith.constant 0 : i32
    %c0_i32_1 = arith.constant 0 : i32
    return %c0_i32, %c0_i32_0 : i32, i32
  }
  func.func @transform_10(%arg0: i32, %arg1: i32) -> (i32, i32) {
    %c0_i32 = arith.constant 0 : i32
    %c0_i32_0 = arith.constant 0 : i32
    %c0_i32_1 = arith.constant 0 : i32
    return %c0_i32, %c0_i32_0 : i32, i32
  }
}

</mosaic_0001>

<llo_original>
// kernel: tpu_custom_call.1
$region0: #{tpu_custom_call.1}
  #allocation0 [shape = 'u32[]', space=smem, size = 0x4, offset = 0x4, fixed_abs, tag = 'smem constant byte address 0x4 - core index']
  #allocation1 [shape = 'u32[72,128]{1,0:T(1,128)}', space=vmem, size = 0x9000, scoped, tag = 'internal scratch']
  #allocation2 [shape = 'bf16[128,128]{1,0:T(8,128)(2,1)}', space=vmem, size = 0x8000, scoped, tag = 'scratch operand']
  #allocation3 [shape = 'bf16[128,128]{1,0:T(8,128)(2,1)}', space=vmem, size = 0x8000, scoped, tag = 'scratch operand']
  #allocation4 [shape = 'f32[1,128]{1,0:T(1,128)}', space=vmem, size = 0x200, scoped, tag = 'scratch operand']
  #allocation5 [shape = 'f32[1,128]{1,0:T(1,128)}', space=vmem, size = 0x200, scoped, tag = 'scratch operand']
  %s0 = inlined_call_operand.hbm [shape: bf16[128,128], index: 0, kind: input, shape index: {}]
  %s1 = inlined_call_operand.hbm [shape: bf16[128,128], index: 1, kind: input, shape index: {}]
  %s2 = inlined_call_operand.hbm [shape: bf16[3,128,128], index: 2, kind: input, shape index: {}]
  %s3 = inlined_call_operand.hbm [shape: f32[3,1,128], index: 3, kind: input, shape index: {}]
  %s4 = inlined_call_operand.hbm [shape: f32[3,128,128], index: 4, kind: input, shape index: {}]
  %s5 = inlined_call_operand.vmem [shape: f32[1,128], index: 5, kind: input, shape index: {}]
  %s6 = inlined_call_operand.hbm [shape: f32[128,128], index: 6, kind: input, shape index: {}]
  %s7 = inlined_call_operand.vmem [shape: f32[1,128], index: 7, kind: input, shape index: {}]
  %s8 = inlined_call_operand.hbm [shape: f32[128,128], index: 8, kind: input, shape index: {}]
  %s9 = inlined_call_operand.vmem [shape: f32[1,128], index: 9, kind: input, shape index: {}]
  %s10 = inlined_call_operand.hbm [shape: f32[1,128], index: 10, kind: output, shape index: {}]
  %s11 = sld [smem:[#allocation0]]
  $region117: #{tpu_custom_call.1} parent=0
    _
  %s13 = ssub.s32 1, %s11
  %s14 = scalar_select 0, %s13, %s11
  $region1: #{tpu_custom_call.1} parent=0
    #allocation6 [shape = 'u8[32768]{0}', space=vmem, size = 0x8000, scoped, tag = 'input window, operand 0, single buffered']
    #allocation7 [shape = 's32[2]{0}', space=sflag, size = 0x8, scoped, tag = 'scoped memory for tpu_custom_call.1']
    #allocation8 [shape = 's32[2]{0}', space=sflag, size = 0x8, scoped, tag = 'scoped memory for tpu_custom_call.1']
    #allocation9 [shape = 'u8[32768]{0}', space=vmem, size = 0x8000, scoped, tag = 'input window, operand 1, single buffered']
    #allocation10 [shape = 's32[1]{0}', space=sflag, size = 0x4, scoped, tag = 'scoped memory for tpu_custom_call.1']
    #allocation11 [shape = 'u8[65536]{0}', space=vmem, size = 0x10000, scoped, tag = 'input window, operand 2']
    #allocation12 [shape = 'u8[1024]{0}', space=vmem, size = 0x400, scoped, tag = 'input window, operand 3']
    #allocation13 [shape = 'u8[131072]{0}', space=vmem, size = 0x20000, scoped, tag = 'input window, operand 4']
    #allocation14 [shape = 'u8[65536]{0}', space=vmem, size = 0x10000, scoped, tag = 'input window, operand 6, single buffered']
    #allocation15 [shape = 'u8[65536]{0}', space=vmem, size = 0x10000, scoped, tag = 'input window, operand 8, single buffered']
    #allocation16 [shape = 's32[1]{0}', space=sflag, size = 0x4, scoped, tag = 'scoped memory for tpu_custom_call.1']
    #allocation17 [shape = 'u8[512]{0}', space=vmem, size = 0x400, scoped, tag = 'output window, operand 0, single buffered']
    %15 = vsyncpa [#allocation7], 0
    %16 = vsyncpa [#allocation10], 0
    %17 = vsyncpa [#allocation16], 0
    %18 = vsyncpa [#allocation8], 0
    loop: start=0, step=1, limit=5
    $region2: #{tpu_custom_call.1} parent=1 // loop_pre_header
      _
    $region3: #{tpu_custom_call.1} parent=1 // loop_header
      %s20 = sphi 0, %s24
      %p21 = scmp.ge.s32.totalorder %s20, 5
      %s27 = sphi 0, %s39
      %s28 = sphi 0, %s35
      %s29 = sphi 0, %s27
      %s30 = sphi 0, %s28
      %s31 = sphi 0, %s29
      %s32 = sphi 0, %s30
      %s42 = sphi 0, %s44
      %s45 = sphi 0, %s42
      %s46 = sphi 0, %s45
      %s62 = sphi 0, %s46
      %s66 = sphi 0, %s66
      %s68 = sphi 0, %s66
      %s69 = sphi 0, %s68
      %s83 = sphi 0, %s69
      %s89 = sphi 0, %s91
      %s92 = sphi 0, %s89
      %s93 = sphi 0, %s92
      %s109 = sphi 0, %s93
      %s115 = sphi 0, %s117
      %s118 = sphi 0, %s115
      %s119 = sphi 0, %s118
      %s135 = sphi 0, %s119
      %s141 = sphi 0, %s143
      %s144 = sphi 0, %s141
      %s145 = sphi 0, %s144
      %s161 = sphi 0, %s145
      %s165 = sphi 0, %s165
      %s167 = sphi 0, %s165
      %s168 = sphi 0, %s167
      %s182 = sphi 0, %s168
      %s186 = sphi 0, %s186
      %s188 = sphi 0, %s186
      %s189 = sphi 0, %s188
      %s203 = sphi 0, %s189
      %s207 = sphi 0, %s207
      %s209 = sphi 0, %s207
      %s210 = sphi 0, %s209
      %s224 = sphi 0, %s210
      %s228 = sphi 0, %s228
      %s230 = sphi 0, %s228
      %s231 = sphi 0, %s230
      %s245 = sphi 0, %s231
      %s249 = sphi 0, %s249
      %s251 = sphi 0, %s249
      %s252 = sphi 0, %s251
      %s266 = sphi 0, %s252
      %s270 = sphi 0, %s270
      %s272 = sphi 0, %s270
      %s273 = sphi 0, %s272
      %s287 = sphi 0, %s273
    $region4: #{tpu_custom_call.1} parent=1 // loop_header_branch
      %23 = sbr.rel (%p21) target = $region8
    $region5: #{tpu_custom_call.1} parent=1 // loop_body
      %s25 = ssub.s32 %s20, 1
      %s26 = ssub.s32 %s20, 2
      %s33 = sadd.s32 1, %s28
      %p34 = scmp.ge.s32.totalorder %s33, 1
      %s35 = scalar_select %p34, 0, %s33
      %s36 = sadd.s32 1, %s27
      %s37 = scalar_select %p34, %s36, %s27
      %p38 = scmp.ge.s32.totalorder %s37, 3
      %s39 = scalar_select %p38, 0, %s37
      %s40 = ssub.s32 %s28, %s35
      %p41 = scmp.eq.s32.totalorder %s40, 0
      %s43 = sadd.s32 %s42, 1
      %s44 = scalar_select %p41, %s42, %s43
      %p47 = pneg %p41
      %p48 = scmp.eq.s32.totalorder %s20, 2
      %p49 = por %p47, %p48
      %p50 = scmp.ne.s32.totalorder %s42, %s45
      %p51 = scmp.eq.s32.totalorder %s20, 0
      %p52 = por %p50, %p51
      %p53 = scmp.ne.s32.totalorder %s42, %s45
      %p54 = scmp.eq.s32.totalorder %s25, 2
      %p55 = por %p53, %p54
      %p56 = scmp.ne.s32.totalorder %s45, %s46
      %p57 = scmp.eq.s32.totalorder %s25, 0
      %p58 = por %p56, %p57
      %p59 = scmp.ne.s32.totalorder %s45, %s46
      %p60 = scmp.eq.s32.totalorder %s26, 2
      %p61 = por %p59, %p60
      %p63 = scmp.ne.s32.totalorder %s46, %s62
      %p64 = scmp.eq.s32.totalorder %s26, 0
      %p65 = por %p63, %p64
      %s67 = sadd.s32 %s66, 1
      %p70 = scmp.eq.s32.totalorder %s20, 2
      %p71 = scmp.ne.s32.totalorder %s66, %s68
      %p72 = scmp.eq.s32.totalorder %s20, 0
      %p73 = por %p71, %p72
      %p74 = scmp.ne.s32.totalorder %s66, %s68
      %p75 = scmp.eq.s32.totalorder %s25, 2
      %p76 = por %p74, %p75
      %p77 = scmp.ne.s32.totalorder %s68, %s69
      %p78 = scmp.eq.s32.totalorder %s25, 0
      %p79 = por %p77, %p78
      %p80 = scmp.ne.s32.totalorder %s68, %s69
      %p81 = scmp.eq.s32.totalorder %s26, 2
      %p82 = por %p80, %p81
      %p84 = scmp.ne.s32.totalorder %s69, %s83
      %p85 = scmp.eq.s32.totalorder %s26, 0
      %p86 = por %p84, %p85
      %s87 = ssub.s32 %s27, %s39
      %p88 = scmp.eq.s32.totalorder %s87, 0
      %s90 = sadd.s32 %s89, 1
      %s91 = scalar_select %p88, %s89, %s90
      %p94 = pneg %p88
      %p95 = scmp.eq.s32.totalorder %s20, 2
      %p96 = por %p94, %p95
      %p97 = scmp.ne.s32.totalorder %s89, %s92
      %p98 = scmp.eq.s32.totalorder %s20, 0
      %p99 = por %p97, %p98
      %p100 = scmp.ne.s32.totalorder %s89, %s92
      %p101 = scmp.eq.s32.totalorder %s25, 2
      %p102 = por %p100, %p101
      %p103 = scmp.ne.s32.totalorder %s92, %s93
      %p104 = scmp.eq.s32.totalorder %s25, 0
      %p105 = por %p103, %p104
      %p106 = scmp.ne.s32.totalorder %s92, %s93
      %p107 = scmp.eq.s32.totalorder %s26, 2
      %p108 = por %p106, %p107
      %p110 = scmp.ne.s32.totalorder %s93, %s109
      %p111 = scmp.eq.s32.totalorder %s26, 0
      %p112 = por %p110, %p111
      %s113 = ssub.s32 %s27, %s39
      %p114 = scmp.eq.s32.totalorder %s113, 0
      %s116 = sadd.s32 %s115, 1
      %s117 = scalar_select %p114, %s115, %s116
      %p120 = pneg %p114
      %p121 = scmp.eq.s32.totalorder %s20, 2
      %p122 = por %p120, %p121
      %p123 = scmp.ne.s32.totalorder %s115, %s118
      %p124 = scmp.eq.s32.totalorder %s20, 0
      %p125 = por %p123, %p124
      %p126 = scmp.ne.s32.totalorder %s115, %s118
      %p127 = scmp.eq.s32.totalorder %s25, 2
      %p128 = por %p126, %p127
      %p129 = scmp.ne.s32.totalorder %s118, %s119
      %p130 = scmp.eq.s32.totalorder %s25, 0
      %p131 = por %p129, %p130
      %p132 = scmp.ne.s32.totalorder %s118, %s119
      %p133 = scmp.eq.s32.totalorder %s26, 2
      %p134 = por %p132, %p133
      %p136 = scmp.ne.s32.totalorder %s119, %s135
      %p137 = scmp.eq.s32.totalorder %s26, 0
      %p138 = por %p136, %p137
      %s139 = ssub.s32 %s27, %s39
      %p140 = scmp.eq.s32.totalorder %s139, 0
      %s142 = sadd.s32 %s141, 1
      %s143 = scalar_select %p140, %s141, %s142
      %p146 = pneg %p140
      %p147 = scmp.eq.s32.totalorder %s20, 2
      %p148 = por %p146, %p147
      %p149 = scmp.ne.s32.totalorder %s141, %s144
      %p150 = scmp.eq.s32.totalorder %s20, 0
      %p151 = por %p149, %p150
      %p152 = scmp.ne.s32.totalorder %s141, %s144
      %p153 = scmp.eq.s32.totalorder %s25, 2
      %p154 = por %p152, %p153
      %p155 = scmp.ne.s32.totalorder %s144, %s145
      %p156 = scmp.eq.s32.totalorder %s25, 0
      %p157 = por %p155, %p156
      %p158 = scmp.ne.s32.totalorder %s144, %s145
      %p159 = scmp.eq.s32.totalorder %s26, 2
      %p160 = por %p158, %p159
      %p162 = scmp.ne.s32.totalorder %s145, %s161
      %p163 = scmp.eq.s32.totalorder %s26, 0
      %p164 = por %p162, %p163
      %s166 = sadd.s32 %s165, 1
      %p169 = scmp.eq.s32.totalorder %s20, 2
      %p170 = scmp.ne.s32.totalorder %s165, %s167
      %p171 = scmp.eq.s32.totalorder %s20, 0
      %p172 = por %p170, %p171
      %p173 = scmp.ne.s32.totalorder %s165, %s167
      %p174 = scmp.eq.s32.totalorder %s25, 2
      %p175 = por %p173, %p174
      %p176 = scmp.ne.s32.totalorder %s167, %s168
      %p177 = scmp.eq.s32.totalorder %s25, 0
      %p178 = por %p176, %p177
      %p179 = scmp.ne.s32.totalorder %s167, %s168
      %p180 = scmp.eq.s32.totalorder %s26, 2
      %p181 = por %p179, %p180
      %p183 = scmp.ne.s32.totalorder %s168, %s182
      %p184 = scmp.eq.s32.totalorder %s26, 0
      %p185 = por %p183, %p184
      %s187 = sadd.s32 %s186, 1
      %p190 = scmp.eq.s32.totalorder %s20, 2
      %p191 = scmp.ne.s32.totalorder %s186, %s188
      %p192 = scmp.eq.s32.totalorder %s20, 0
      %p193 = por %p191, %p192
      %p194 = scmp.ne.s32.totalorder %s186, %s188
      %p195 = scmp.eq.s32.totalorder %s25, 2
      %p196 = por %p194, %p195
      %p197 = scmp.ne.s32.totalorder %s188, %s189
      %p198 = scmp.eq.s32.totalorder %s25, 0
      %p199 = por %p197, %p198
      %p200 = scmp.ne.s32.totalorder %s188, %s189
      %p201 = scmp.eq.s32.totalorder %s26, 2
      %p202 = por %p200, %p201
      %p204 = scmp.ne.s32.totalorder %s189, %s203
      %p205 = scmp.eq.s32.totalorder %s26, 0
      %p206 = por %p204, %p205
      %s208 = sadd.s32 %s207, 1
      %p211 = scmp.eq.s32.totalorder %s20, 2
      %p212 = scmp.ne.s32.totalorder %s207, %s209
      %p213 = scmp.eq.s32.totalorder %s20, 0
      %p214 = por %p212, %p213
      %p215 = scmp.ne.s32.totalorder %s207, %s209
      %p216 = scmp.eq.s32.totalorder %s25, 2
      %p217 = por %p215, %p216
      %p218 = scmp.ne.s32.totalorder %s209, %s210
      %p219 = scmp.eq.s32.totalorder %s25, 0
      %p220 = por %p218, %p219
      %p221 = scmp.ne.s32.totalorder %s209, %s210
      %p222 = scmp.eq.s32.totalorder %s26, 2
      %p223 = por %p221, %p222
      %p225 = scmp.ne.s32.totalorder %s210, %s224
      %p226 = scmp.eq.s32.totalorder %s26, 0
      %p227 = por %p225, %p226
      %s229 = sadd.s32 %s228, 1
      %p232 = scmp.eq.s32.totalorder %s20, 2
      %p233 = scmp.ne.s32.totalorder %s228, %s230
      %p234 = scmp.eq.s32.totalorder %s20, 0
      %p235 = por %p233, %p234
      %p236 = scmp.ne.s32.totalorder %s228, %s230
      %p237 = scmp.eq.s32.totalorder %s25, 2
      %p238 = por %p236, %p237
      %p239 = scmp.ne.s32.totalorder %s230, %s231
      %p240 = scmp.eq.s32.totalorder %s25, 0
      %p241 = por %p239, %p240
      %p242 = scmp.ne.s32.totalorder %s230, %s231
      %p243 = scmp.eq.s32.totalorder %s26, 2
      %p244 = por %p242, %p243
      %p246 = scmp.ne.s32.totalorder %s231, %s245
      %p247 = scmp.eq.s32.totalorder %s26, 0
      %p248 = por %p246, %p247
      %s250 = sadd.s32 %s249, 1
      %p253 = scmp.eq.s32.totalorder %s20, 2
      %p254 = scmp.ne.s32.totalorder %s249, %s251
      %p255 = scmp.eq.s32.totalorder %s20, 0
      %p256 = por %p254, %p255
      %p257 = scmp.ne.s32.totalorder %s249, %s251
      %p258 = scmp.eq.s32.totalorder %s25, 2
      %p259 = por %p257, %p258
      %p260 = scmp.ne.s32.totalorder %s251, %s252
      %p261 = scmp.eq.s32.totalorder %s25, 0
      %p262 = por %p260, %p261
      %p263 = scmp.ne.s32.totalorder %s251, %s252
      %p264 = scmp.eq.s32.totalorder %s26, 2
      %p265 = por %p263, %p264
      %p267 = scmp.ne.s32.totalorder %s252, %s266
      %p268 = scmp.eq.s32.totalorder %s26, 0
      %p269 = por %p267, %p268
      %s271 = sadd.s32 %s270, 1
      %p274 = scmp.eq.s32.totalorder %s20, 2
      %p275 = scmp.ne.s32.totalorder %s270, %s272
      %p276 = scmp.eq.s32.totalorder %s20, 0
      %p277 = por %p275, %p276
      %p278 = scmp.ne.s32.totalorder %s270, %s272
      %p279 = scmp.eq.s32.totalorder %s25, 2
      %p280 = por %p278, %p279
      %p281 = scmp.ne.s32.totalorder %s272, %s273
      %p282 = scmp.eq.s32.totalorder %s25, 0
      %p283 = por %p281, %p282
      %p284 = scmp.ne.s32.totalorder %s272, %s273
      %p285 = scmp.eq.s32.totalorder %s26, 2
      %p286 = por %p284, %p285
      %p288 = scmp.ne.s32.totalorder %s273, %s287
      %p289 = scmp.eq.s32.totalorder %s26, 0
      %p290 = por %p288, %p289
      %p291 = scmp.le.s32.totalorder 1, %s20
      %p292 = scmp.lt.s32.totalorder %s20, 4
      %p293 = pnand %p291, %p292
      %p294 = pneg %p293
      // Predicated region
      $region9: #{tpu_custom_call.1} parent=5 // pred_check
        _
      $region10: #{tpu_custom_call.1} parent=5 // pred_check_branch
        %296 = sbr.rel (%p293) target = $region12
      $region11: #{tpu_custom_call.1} parent=5 // pred_region
        %s297 = ssub.s32 %s20, 1
        // Predicated region
        $region13: #{tpu_custom_call.1} parent=11 // pred_check
          %p298 = pneg %p58
        $region14: #{tpu_custom_call.1} parent=11 // pred_check_branch
          %300 = sbr.rel (%p298) target = $region16
        $region15: #{tpu_custom_call.1} parent=11 // pred_region
          %s301 = smul.u32 16, %s30
          %303 = vsyncadd [#allocation7], 0
          %s304 = smul.addr %s301, 4
          %s305 = scalar_lea.hbm %s0, %s304
          %s306 = sshll.u32 %s305, 4
          %s307 = int_to_ptr.hbm [resolvable:$true] %s306
          %s308 = sshll.u32 [#allocation6], 4
          %s309 = int_to_ptr.vmem [resolvable:$true] %s308
          %314 = dma.hbm_to_vmem [thread:$0]  %s307, 1024, %s309, [#allocation7], 64, 64, 4
        $region16: #{tpu_custom_call.1} parent=11 // pred_fallthru
          _
        // Predicated region
        $region17: #{tpu_custom_call.1} parent=11 // pred_check
          %p315 = pneg %p79
        $region18: #{tpu_custom_call.1} parent=11 // pred_check_branch
          %317 = sbr.rel (%p315) target = $region20
        $region19: #{tpu_custom_call.1} parent=11 // pred_region
          %319 = vsyncadd [#allocation10], 0
          %s320 = sshll.u32 %s1, 4
          %s321 = int_to_ptr.hbm [resolvable:$true] %s320
          %s322 = sshll.u32 [#allocation9], 4
          %s323 = int_to_ptr.vmem [resolvable:$true] %s322
          %328 = dma.hbm_to_vmem [thread:$0]  %s321, 1024, %s323, [#allocation10], 64, 64, 4
        $region20: #{tpu_custom_call.1} parent=11 // pred_fallthru
          _
        // Predicated region
        $region21: #{tpu_custom_call.1} parent=11 // pred_check
          %p329 = pneg %p178
        $region22: #{tpu_custom_call.1} parent=11 // pred_check_branch
          %331 = sbr.rel (%p329) target = $region24
        $region23: #{tpu_custom_call.1} parent=11 // pred_region
          _
        $region24: #{tpu_custom_call.1} parent=11 // pred_fallthru
          _
        // Predicated region
        $region25: #{tpu_custom_call.1} parent=11 // pred_check
          %p332 = pneg %p199
        $region26: #{tpu_custom_call.1} parent=11 // pred_check_branch
          %334 = sbr.rel (%p332) target = $region28
        $region27: #{tpu_custom_call.1} parent=11 // pred_region
          %336 = vsyncadd [#allocation10], 0
          %s337 = sshll.u32 %s6, 4
          %s338 = int_to_ptr.hbm [resolvable:$true] %s337
          %s339 = sshll.u32 [#allocation14], 4
          %s340 = int_to_ptr.vmem [resolvable:$true] %s339
          %345 = dma.hbm_to_vmem [thread:$0]  %s338, 2048, %s340, [#allocation10], 128, 128, 8
        $region28: #{tpu_custom_call.1} parent=11 // pred_fallthru
          _
        // Predicated region
        $region29: #{tpu_custom_call.1} parent=11 // pred_check
          %p346 = pneg %p220
        $region30: #{tpu_custom_call.1} parent=11 // pred_check_branch
          %348 = sbr.rel (%p346) target = $region32
        $region31: #{tpu_custom_call.1} parent=11 // pred_region
          _
        $region32: #{tpu_custom_call.1} parent=11 // pred_fallthru
          _
        // Predicated region
        $region33: #{tpu_custom_call.1} parent=11 // pred_check
          %p349 = pneg %p241
        $region34: #{tpu_custom_call.1} parent=11 // pred_check_branch
          %351 = sbr.rel (%p349) target = $region36
        $region35: #{tpu_custom_call.1} parent=11 // pred_region
          %353 = vsyncadd [#allocation16], 0
          %s354 = sshll.u32 %s8, 4
          %s355 = int_to_ptr.hbm [resolvable:$true] %s354
          %s356 = sshll.u32 [#allocation15], 4
          %s357 = int_to_ptr.vmem [resolvable:$true] %s356
          %362 = dma.hbm_to_vmem [thread:$0]  %s355, 2048, %s357, [#allocation16], 128, 128, 8
        $region36: #{tpu_custom_call.1} parent=11 // pred_fallthru
          _
        // Predicated region
        $region37: #{tpu_custom_call.1} parent=11 // pred_check
          %p363 = pneg %p262
        $region38: #{tpu_custom_call.1} parent=11 // pred_check_branch
          %365 = sbr.rel (%p363) target = $region40
        $region39: #{tpu_custom_call.1} parent=11 // pred_region
          _
        $region40: #{tpu_custom_call.1} parent=11 // pred_fallthru
          _
      $region12: #{tpu_custom_call.1} parent=5 // pred_fallthru
        _
      %p366 = scmp.lt.s32.totalorder %s20, 3
      // Predicated region
      $region41: #{tpu_custom_call.1} parent=5 // pred_check
        %p367 = pneg %p366
      $region42: #{tpu_custom_call.1} parent=5 // pred_check_branch
        %369 = sbr.rel (%p367) target = $region44
      $region43: #{tpu_custom_call.1} parent=5 // pred_region
        // Predicated region
        $region45: #{tpu_custom_call.1} parent=43 // pred_check
          %p370 = pneg %p99
        $region46: #{tpu_custom_call.1} parent=43 // pred_check_branch
          %372 = sbr.rel (%p370) target = $region48
        $region47: #{tpu_custom_call.1} parent=43 // pred_region
          %s373 = sand.u32 %s20, 1
          %s374 = scalar_lea.sflag [#allocation7], %s373
          %s375 = sand.u32 %s89, 1
          %s376 = smul.addr %s375, 64
          %s377 = scalar_lea.vmem [#allocation11], %s376
          %379 = vsyncadd %s374, 0
          %s380 = smul.addr %s27, 16
          %s381 = smul.addr %s380, 4
          %s382 = scalar_lea.hbm %s2, %s381
          %s383 = sshll.u32 %s382, 4
          %s384 = int_to_ptr.hbm [resolvable:$true] %s383
          %s385 = sshll.u32 %s377, 4
          %s386 = int_to_ptr.vmem [resolvable:$true] %s385
          %391 = dma.hbm_to_vmem [thread:$0]  %s384, 1024, %s386, %s374, 64, 64, 4
        $region48: #{tpu_custom_call.1} parent=43 // pred_fallthru
          _
        // Predicated region
        $region49: #{tpu_custom_call.1} parent=43 // pred_check
          %p392 = pneg %p125
        $region50: #{tpu_custom_call.1} parent=43 // pred_check_branch
          %394 = sbr.rel (%p392) target = $region52
        $region51: #{tpu_custom_call.1} parent=43 // pred_region
          %s395 = sand.u32 %s20, 1
          %s396 = scalar_lea.sflag [#allocation7], %s395
          %s397 = sand.u32 %s115, 1
          %s398 = scalar_lea.vmem [#allocation12], %s397
          %400 = vsyncadd %s396, 0
          %s401 = scalar_lea.hbm %s3, %s27
          %s403 = sshll.u32 %s401, 4
          %s404 = int_to_ptr.hbm [resolvable:$true] %s403
          %s405 = sshll.u32 %s398, 4
          %s406 = int_to_ptr.vmem [resolvable:$true] %s405
          %408 = dma.hbm_to_vmem [thread:$0]  %s404, 16, %s406, %s396
        $region52: #{tpu_custom_call.1} parent=43 // pred_fallthru
          _
        // Predicated region
        $region53: #{tpu_custom_call.1} parent=43 // pred_check
          %p409 = pneg %p151
        $region54: #{tpu_custom_call.1} parent=43 // pred_check_branch
          %411 = sbr.rel (%p409) target = $region56
        $region55: #{tpu_custom_call.1} parent=43 // pred_region
          %s412 = sand.u32 %s20, 1
          %s413 = scalar_lea.sflag [#allocation7], %s412
          %s414 = sand.u32 %s141, 1
          %s415 = smul.addr %s414, 128
          %s416 = scalar_lea.vmem [#allocation13], %s415
          %418 = vsyncadd %s413, 0
          %s419 = smul.addr %s27, 16
          %s420 = smul.addr %s419, 8
          %s421 = scalar_lea.hbm %s4, %s420
          %s422 = sshll.u32 %s421, 4
          %s423 = int_to_ptr.hbm [resolvable:$true] %s422
          %s424 = sshll.u32 %s416, 4
          %s425 = int_to_ptr.vmem [resolvable:$true] %s424
          %430 = dma.hbm_to_vmem [thread:$0]  %s423, 2048, %s425, %s413, 128, 128, 8
        $region56: #{tpu_custom_call.1} parent=43 // pred_fallthru
          _
      $region44: #{tpu_custom_call.1} parent=5 // pred_fallthru
        _
      %p431 = scmp.le.s32.totalorder 1, %s20
      %p432 = scmp.lt.s32.totalorder %s20, 4
      %p433 = pnand %p431, %p432
      %p434 = pneg %p433
      // Predicated region
      $region57: #{tpu_custom_call.1} parent=5 // pred_check
        _
      $region58: #{tpu_custom_call.1} parent=5 // pred_check_branch
        %436 = sbr.rel (%p433) target = $region60
      $region59: #{tpu_custom_call.1} parent=5 // pred_region
        %s437 = ssub.s32 %s20, 1
        // Predicated region
        $region61: #{tpu_custom_call.1} parent=59 // pred_check
          %p438 = pneg %p58
        $region62: #{tpu_custom_call.1} parent=59 // pred_check_branch
          %440 = sbr.rel (%p438) target = $region64
        $region63: #{tpu_custom_call.1} parent=59 // pred_region
          %442 = dma.done [#allocation7], 1024
        $region64: #{tpu_custom_call.1} parent=59 // pred_fallthru
          _
        // Predicated region
        $region65: #{tpu_custom_call.1} parent=59 // pred_check
          %p443 = pneg %p79
        $region66: #{tpu_custom_call.1} parent=59 // pred_check_branch
          %445 = sbr.rel (%p443) target = $region68
        $region67: #{tpu_custom_call.1} parent=59 // pred_region
          %447 = dma.done [#allocation10], 1024
        $region68: #{tpu_custom_call.1} parent=59 // pred_fallthru
          _
        %s448 = sand.u32 %s25, 1
        %s449 = scalar_lea.sflag [#allocation7], %s448
        %s450 = sand.u32 %s92, 1
        %s451 = smul.addr %s450, 64
        %s452 = scalar_lea.vmem [#allocation11], %s451
        // Predicated region
        $region69: #{tpu_custom_call.1} parent=59 // pred_check
          %p453 = pneg %p105
        $region70: #{tpu_custom_call.1} parent=59 // pred_check_branch
          %455 = sbr.rel (%p453) target = $region72
        $region71: #{tpu_custom_call.1} parent=59 // pred_region
          %457 = dma.done %s449, 1024
        $region72: #{tpu_custom_call.1} parent=59 // pred_fallthru
          _
        %s458 = sand.u32 %s25, 1
        %s459 = scalar_lea.sflag [#allocation7], %s458
        %s460 = sand.u32 %s118, 1
        %s461 = scalar_lea.vmem [#allocation12], %s460
        // Predicated region
        $region73: #{tpu_custom_call.1} parent=59 // pred_check
          %p462 = pneg %p131
        $region74: #{tpu_custom_call.1} parent=59 // pred_check_branch
          %464 = sbr.rel (%p462) target = $region76
        $region75: #{tpu_custom_call.1} parent=59 // pred_region
          %466 = dma.done %s459, 16
        $region76: #{tpu_custom_call.1} parent=59 // pred_fallthru
          _
        %s467 = sand.u32 %s25, 1
        %s468 = scalar_lea.sflag [#allocation7], %s467
        %s469 = sand.u32 %s144, 1
        %s470 = smul.addr %s469, 128
        %s471 = scalar_lea.vmem [#allocation13], %s470
        // Predicated region
        $region77: #{tpu_custom_call.1} parent=59 // pred_check
          %p472 = pneg %p157
        $region78: #{tpu_custom_call.1} parent=59 // pred_check_branch
          %474 = sbr.rel (%p472) target = $region80
        $region79: #{tpu_custom_call.1} parent=59 // pred_region
          %476 = dma.done %s468, 2048
        $region80: #{tpu_custom_call.1} parent=59 // pred_fallthru
          _
        // Predicated region
        $region81: #{tpu_custom_call.1} parent=59 // pred_check
          %p477 = pneg %p199
        $region82: #{tpu_custom_call.1} parent=59 // pred_check_branch
          %479 = sbr.rel (%p477) target = $region84
        $region83: #{tpu_custom_call.1} parent=59 // pred_region
          %481 = dma.done [#allocation10], 2048
        $region84: #{tpu_custom_call.1} parent=59 // pred_fallthru
          _
        // Predicated region
        $region85: #{tpu_custom_call.1} parent=59 // pred_check
          %p482 = pneg %p241
        $region86: #{tpu_custom_call.1} parent=59 // pred_check_branch
          %484 = sbr.rel (%p482) target = $region88
        $region87: #{tpu_custom_call.1} parent=59 // pred_region
          %486 = dma.done [#allocation16], 2048
        $region88: #{tpu_custom_call.1} parent=59 // pred_fallthru
          _
        %p487 = pneg %p58
        %p488 = pneg %p55
        %p489 = pneg %p79
        %p490 = pneg %p76
        %s491 = sand.u32 %s25, 1
        %s492 = scalar_lea.sflag [#allocation7], %s491
        %s493 = sand.u32 %s92, 1
        %s494 = smul.addr %s493, 64
        %s495 = scalar_lea.vmem [#allocation11], %s494
        %p496 = pneg %p105
        %p497 = pneg %p102
        %s498 = sand.u32 %s25, 1
        %s499 = scalar_lea.sflag [#allocation7], %s498
        %s500 = sand.u32 %s118, 1
        %s501 = scalar_lea.vmem [#allocation12], %s500
        %p502 = pneg %p131
        %p503 = pneg %p128
        %s504 = sand.u32 %s25, 1
        %s505 = scalar_lea.sflag [#allocation7], %s504
        %s506 = sand.u32 %s144, 1
        %s507 = smul.addr %s506, 128
        %s508 = scalar_lea.vmem [#allocation13], %s507
        %p509 = pneg %p157
        %p510 = pneg %p154
        %p511 = pneg %p178
        %p512 = pneg %p175
        %p513 = pneg %p199
        %p514 = pneg %p196
        %p515 = pneg %p220
        %p516 = pneg %p217
        %p517 = pneg %p241
        %p518 = pneg %p238
        %p519 = pneg %p262
        %p520 = pneg %p259
        %p521 = pneg %p283
        %p522 = pneg %p280
        %s523 = smul.u32 16, %s30
        %p524 = scmp.eq.s32.totalorder %s29, 0
        %p525 = scmp.eq.s32.totalorder %s30, 0
        %p526 = pnand %p524, %p525
        %p527 = pneg %p526
        // Predicated region
        $region89: #{tpu_custom_call.1} parent=59 // pred_check
          _
        $region90: #{tpu_custom_call.1} parent=59 // pred_check_branch
          %529 = sbr.rel (%p526) target = $region92
        $region91: #{tpu_custom_call.1} parent=59 // pred_region
          %v530 = vld [vmem:[#allocation9] sm:$0xf]
          %v531 = vld [vmem:[#allocation9 + $0x4] sm:$0xf]
          %v532 = vld [vmem:[#allocation9 + $0x8] sm:$0xf]
          %v533 = vld [vmem:[#allocation9 + $0xc] sm:$0xf]
          %v534 = vld [vmem:[#allocation9 + $0x10] sm:$0xf]
          %v535 = vld [vmem:[#allocation9 + $0x14] sm:$0xf]
          %v536 = vld [vmem:[#allocation9 + $0x18] sm:$0xf]
          %v537 = vld [vmem:[#allocation9 + $0x1c] sm:$0xf]
          %v538 = vld [vmem:[#allocation9 + $0x20] sm:$0xf]
          %v539 = vld [vmem:[#allocation9 + $0x24] sm:$0xf]
          %v540 = vld [vmem:[#allocation9 + $0x28] sm:$0xf]
          %v541 = vld [vmem:[#allocation9 + $0x2c] sm:$0xf]
          %v542 = vld [vmem:[#allocation9 + $0x30] sm:$0xf]
          %v543 = vld [vmem:[#allocation9 + $0x34] sm:$0xf]
          %v544 = vld [vmem:[#allocation9 + $0x38] sm:$0xf]
          %v545 = vld [vmem:[#allocation9 + $0x3c] sm:$0xf]
          %546 = vst [vmem:[#allocation2] sm:$0xf] %v530
          %547 = vst [vmem:[#allocation2 + $0x4] sm:$0xf] %v531
          %548 = vst [vmem:[#allocation2 + $0x8] sm:$0xf] %v532
          %549 = vst [vmem:[#allocation2 + $0xc] sm:$0xf] %v533
          %550 = vst [vmem:[#allocation2 + $0x10] sm:$0xf] %v534
          %551 = vst [vmem:[#allocation2 + $0x14] sm:$0xf] %v535
          %552 = vst [vmem:[#allocation2 + $0x18] sm:$0xf] %v536
          %553 = vst [vmem:[#allocation2 + $0x1c] sm:$0xf] %v537
          %554 = vst [vmem:[#allocation2 + $0x20] sm:$0xf] %v538
          %555 = vst [vmem:[#allocation2 + $0x24] sm:$0xf] %v539
          %556 = vst [vmem:[#allocation2 + $0x28] sm:$0xf] %v540
          %557 = vst [vmem:[#allocation2 + $0x2c] sm:$0xf] %v541
          %558 = vst [vmem:[#allocation2 + $0x30] sm:$0xf] %v542
          %559 = vst [vmem:[#allocation2 + $0x34] sm:$0xf] %v543
          %560 = vst [vmem:[#allocation2 + $0x38] sm:$0xf] %v544
          %561 = vst [vmem:[#allocation2 + $0x3c] sm:$0xf] %v545
          %562 = vst [vmem:[#allocation5] sm:$0x1] 0.0
        $region92: #{tpu_custom_call.1} parent=59 // pred_fallthru
          _
        // Predicated region
        $region93: #{tpu_custom_call.1} parent=59 // pred_check
          %p563 = pneg %p525
        $region94: #{tpu_custom_call.1} parent=59 // pred_check_branch
          %565 = sbr.rel (%p563) target = $region96
        $region95: #{tpu_custom_call.1} parent=59 // pred_region
          %v566 = vld [vmem:[#allocation2] sm:$0xf]
          %v567 = vld [vmem:[#allocation2 + $0x4] sm:$0xf]
          %v568 = vld [vmem:[#allocation2 + $0x8] sm:$0xf]
          %v569 = vld [vmem:[#allocation2 + $0xc] sm:$0xf]
          %v570 = vld [vmem:[#allocation2 + $0x10] sm:$0xf]
          %v571 = vld [vmem:[#allocation2 + $0x14] sm:$0xf]
          %v572 = vld [vmem:[#allocation2 + $0x18] sm:$0xf]
          %v573 = vld [vmem:[#allocation2 + $0x1c] sm:$0xf]
          %v574 = vld [vmem:[#allocation2 + $0x20] sm:$0xf]
          %v575 = vld [vmem:[#allocation2 + $0x24] sm:$0xf]
          %v576 = vld [vmem:[#allocation2 + $0x28] sm:$0xf]
          %v577 = vld [vmem:[#allocation2 + $0x2c] sm:$0xf]
          %v578 = vld [vmem:[#allocation2 + $0x30] sm:$0xf]
          %v579 = vld [vmem:[#allocation2 + $0x34] sm:$0xf]
          %v580 = vld [vmem:[#allocation2 + $0x38] sm:$0xf]
          %v581 = vld [vmem:[#allocation2 + $0x3c] sm:$0xf]
          %v582 = vld [vmem:[%s452] sm:$0xf]
          %v583 = vld [vmem:[%s452 + $0x4] sm:$0xf]
          %v584 = vld [vmem:[%s452 + $0x8] sm:$0xf]
          %v585 = vld [vmem:[%s452 + $0xc] sm:$0xf]
          %v586 = vld [vmem:[%s452 + $0x10] sm:$0xf]
          %v587 = vld [vmem:[%s452 + $0x14] sm:$0xf]
          %v588 = vld [vmem:[%s452 + $0x18] sm:$0xf]
          %v589 = vld [vmem:[%s452 + $0x1c] sm:$0xf]
          %v590 = vld [vmem:[%s452 + $0x20] sm:$0xf]
          %v591 = vld [vmem:[%s452 + $0x24] sm:$0xf]
          %v592 = vld [vmem:[%s452 + $0x28] sm:$0xf]
          %v593 = vld [vmem:[%s452 + $0x2c] sm:$0xf]
          %v594 = vld [vmem:[%s452 + $0x30] sm:$0xf]
          %v595 = vld [vmem:[%s452 + $0x34] sm:$0xf]
          %v596 = vld [vmem:[%s452 + $0x38] sm:$0xf]
          %v597 = vld [vmem:[%s452 + $0x3c] sm:$0xf]
          %v614 = vunpack.c.l.b16 %v566
          %v615 = vunpack.c.l.b16 %v567
          %v616 = vunpack.c.l.b16 %v568
          %v617 = vunpack.c.l.b16 %v569
          %v618 = vunpack.c.l.b16 %v570
          %v619 = vunpack.c.l.b16 %v571
          %v620 = vunpack.c.l.b16 %v572
          %v621 = vunpack.c.l.b16 %v573
          %v622 = vunpack.c.l.b16 %v574
          %v623 = vunpack.c.l.b16 %v575
          %v624 = vunpack.c.l.b16 %v576
          %v625 = vunpack.c.l.b16 %v577
          %v626 = vunpack.c.l.b16 %v578
          %v627 = vunpack.c.l.b16 %v579
          %v628 = vunpack.c.l.b16 %v580
          %v629 = vunpack.c.l.b16 %v581
          %v630 = vpack.c.b16 %v615, %v614
          %v631 = vpack.c.b16 %v617, %v616
          %v632 = vpack.c.b16 %v619, %v618
          %v633 = vpack.c.b16 %v621, %v620
          %v634 = vpack.c.b16 %v623, %v622
          %v635 = vpack.c.b16 %v625, %v624
          %v636 = vpack.c.b16 %v627, %v626
          %v637 = vpack.c.b16 %v629, %v628
          %v662 = vunpack.c.l.b16 %v582
          %v663 = vunpack.c.l.b16 %v583
          %v664 = vunpack.c.l.b16 %v584
          %v665 = vunpack.c.l.b16 %v585
          %v666 = vunpack.c.l.b16 %v586
          %v667 = vunpack.c.l.b16 %v587
          %v668 = vunpack.c.l.b16 %v588
          %v669 = vunpack.c.l.b16 %v589
          %v670 = vunpack.c.l.b16 %v590
          %v671 = vunpack.c.l.b16 %v591
          %v672 = vunpack.c.l.b16 %v592
          %v673 = vunpack.c.l.b16 %v593
          %v674 = vunpack.c.l.b16 %v594
          %v675 = vunpack.c.l.b16 %v595
          %v676 = vunpack.c.l.b16 %v596
          %v677 = vunpack.c.l.b16 %v597
          %v678 = vpack.c.b16 %v663, %v662
          %v679 = vpack.c.b16 %v665, %v664
          %v680 = vpack.c.b16 %v667, %v666
          %v681 = vpack.c.b16 %v669, %v668
          %v682 = vpack.c.b16 %v671, %v670
          %v683 = vpack.c.b16 %v673, %v672
          %v684 = vpack.c.b16 %v675, %v674
          %v685 = vpack.c.b16 %v677, %v676
          %694 = vmatpush.bf16.msra.mxu0 %v685
          %695 = vmatpush.bf16.msra.mxu0 %v684
          %696 = vmatpush.bf16.msra.mxu0 %v683
          %697 = vmatpush.bf16.msra.mxu0 %v682
          %698 = vmatpush.bf16.msra.mxu0 %v681
          %699 = vmatpush.bf16.msra.mxu0 %v680
          %700 = vmatpush.bf16.msra.mxu0 %v679
          %701 = vmatpush.bf16.msra.mxu0 %v678
          %702 = vmatmul.bf16.gmra.mxu0 %v630
          %v703 = vpop.f32.mrf.mxu0
          %v704 = vadd.f32 0.0, %v703
          %v705 = vpop.f32.mrf.mxu0
          %v706 = vadd.f32 0.0, %v705
          %707 = vmatmul.bf16.gmra.mxu0 %v631
          %v708 = vpop.f32.mrf.mxu0
          %v709 = vadd.f32 0.0, %v708
          %v710 = vpop.f32.mrf.mxu0
          %v711 = vadd.f32 0.0, %v710
          %712 = vmatmul.bf16.gmra.mxu0 %v632
          %v713 = vpop.f32.mrf.mxu0
          %v714 = vadd.f32 0.0, %v713
          %v715 = vpop.f32.mrf.mxu0
          %v716 = vadd.f32 0.0, %v715
          %717 = vmatmul.bf16.gmra.mxu0 %v633
          %v718 = vpop.f32.mrf.mxu0
          %v719 = vadd.f32 0.0, %v718
          %v720 = vpop.f32.mrf.mxu0
          %v721 = vadd.f32 0.0, %v720
          %722 = vmatmul.bf16.gmra.mxu0 %v634
          %v723 = vpop.f32.mrf.mxu0
          %v724 = vadd.f32 0.0, %v723
          %v725 = vpop.f32.mrf.mxu0
          %v726 = vadd.f32 0.0, %v725
          %727 = vmatmul.bf16.gmra.mxu0 %v635
          %v728 = vpop.f32.mrf.mxu0
          %v729 = vadd.f32 0.0, %v728
          %v730 = vpop.f32.mrf.mxu0
          %v731 = vadd.f32 0.0, %v730
          %732 = vmatmul.bf16.gmra.mxu0 %v636
          %v733 = vpop.f32.mrf.mxu0
          %v734 = vadd.f32 0.0, %v733
          %v735 = vpop.f32.mrf.mxu0
          %v736 = vadd.f32 0.0, %v735
          %737 = vmatmul.bf16.gmra.mxu0 %v637
          %v738 = vpop.f32.mrf.mxu0
          %v739 = vadd.f32 0.0, %v738
          %v740 = vpop.f32.mrf.mxu0
          %v741 = vadd.f32 0.0, %v740
          %742 = vdwg.mxu0
          %v743 = vpack.c.bf16 %v704, %v704
          %v744 = vpack.c.bf16 %v706, %v706
          %v745 = vpack.c.bf16 %v709, %v709
          %v746 = vpack.c.bf16 %v711, %v711
          %v747 = vpack.c.bf16 %v714, %v714
          %v748 = vpack.c.bf16 %v716, %v716
          %v749 = vpack.c.bf16 %v719, %v719
          %v750 = vpack.c.bf16 %v721, %v721
          %v751 = vpack.c.bf16 %v724, %v724
          %v752 = vpack.c.bf16 %v726, %v726
          %v753 = vpack.c.bf16 %v729, %v729
          %v754 = vpack.c.bf16 %v731, %v731
          %v755 = vpack.c.bf16 %v734, %v734
          %v756 = vpack.c.bf16 %v736, %v736
          %v757 = vpack.c.bf16 %v739, %v739
          %v758 = vpack.c.bf16 %v741, %v741
          %759 = vst [vmem:[#allocation3] sm:$0xf] %v743
          %760 = vst [vmem:[#allocation3 + $0x4] sm:$0xf] %v744
          %761 = vst [vmem:[#allocation3 + $0x8] sm:$0xf] %v745
          %762 = vst [vmem:[#allocation3 + $0xc] sm:$0xf] %v746
          %763 = vst [vmem:[#allocation3 + $0x10] sm:$0xf] %v747
          %764 = vst [vmem:[#allocation3 + $0x14] sm:$0xf] %v748
          %765 = vst [vmem:[#allocation3 + $0x18] sm:$0xf] %v749
          %766 = vst [vmem:[#allocation3 + $0x1c] sm:$0xf] %v750
          %767 = vst [vmem:[#allocation3 + $0x20] sm:$0xf] %v751
          %768 = vst [vmem:[#allocation3 + $0x24] sm:$0xf] %v752
          %769 = vst [vmem:[#allocation3 + $0x28] sm:$0xf] %v753
          %770 = vst [vmem:[#allocation3 + $0x2c] sm:$0xf] %v754
          %771 = vst [vmem:[#allocation3 + $0x30] sm:$0xf] %v755
          %772 = vst [vmem:[#allocation3 + $0x34] sm:$0xf] %v756
          %773 = vst [vmem:[#allocation3 + $0x38] sm:$0xf] %v757
          %774 = vst [vmem:[#allocation3 + $0x3c] sm:$0xf] %v758
          %775 = vst [vmem:[#allocation4] sm:$0x1] 0.0
        $region96: #{tpu_custom_call.1} parent=59 // pred_fallthru
          _
        %v776 = vld [vmem:[#allocation6] sm:$0xf]
        %v777 = vld [vmem:[#allocation6 + $0x4] sm:$0xf]
        %v778 = vld [vmem:[#allocation6 + $0x8] sm:$0xf]
        %v779 = vld [vmem:[#allocation6 + $0xc] sm:$0xf]
        %v780 = vld [vmem:[#allocation6 + $0x10] sm:$0xf]
        %v781 = vld [vmem:[#allocation6 + $0x14] sm:$0xf]
        %v782 = vld [vmem:[#allocation6 + $0x18] sm:$0xf]
        %v783 = vld [vmem:[#allocation6 + $0x1c] sm:$0xf]
        %v784 = vld [vmem:[#allocation6 + $0x20] sm:$0xf]
        %v785 = vld [vmem:[#allocation6 + $0x24] sm:$0xf]
        %v786 = vld [vmem:[#allocation6 + $0x28] sm:$0xf]
        %v787 = vld [vmem:[#allocation6 + $0x2c] sm:$0xf]
        %v788 = vld [vmem:[#allocation6 + $0x30] sm:$0xf]
        %v789 = vld [vmem:[#allocation6 + $0x34] sm:$0xf]
        %v790 = vld [vmem:[#allocation6 + $0x38] sm:$0xf]
        %v791 = vld [vmem:[#allocation6 + $0x3c] sm:$0xf]
        %v792 = vld [vmem:[#allocation3] sm:$0xf]
        %v793 = vld [vmem:[#allocation3 + $0x4] sm:$0xf]
        %v794 = vld [vmem:[#allocation3 + $0x8] sm:$0xf]
        %v795 = vld [vmem:[#allocation3 + $0xc] sm:$0xf]
        %v796 = vld [vmem:[#allocation3 + $0x10] sm:$0xf]
        %v797 = vld [vmem:[#allocation3 + $0x14] sm:$0xf]
        %v798 = vld [vmem:[#allocation3 + $0x18] sm:$0xf]
        %v799 = vld [vmem:[#allocation3 + $0x1c] sm:$0xf]
        %v800 = vld [vmem:[#allocation3 + $0x20] sm:$0xf]
        %v801 = vld [vmem:[#allocation3 + $0x24] sm:$0xf]
        %v802 = vld [vmem:[#allocation3 + $0x28] sm:$0xf]
        %v803 = vld [vmem:[#allocation3 + $0x2c] sm:$0xf]
        %v804 = vld [vmem:[#allocation3 + $0x30] sm:$0xf]
        %v805 = vld [vmem:[#allocation3 + $0x34] sm:$0xf]
        %v806 = vld [vmem:[#allocation3 + $0x38] sm:$0xf]
        %v807 = vld [vmem:[#allocation3 + $0x3c] sm:$0xf]
        %v808 = vld [vmem:[%s461] sm:$0x1]
        %v810 = vperm.slane %v808, 0
        %v828 = vunpack.c.l.b16 %v776
        %v829 = vunpack.c.l.b16 %v777
        %v830 = vunpack.c.l.b16 %v778
        %v831 = vunpack.c.l.b16 %v779
        %v832 = vunpack.c.l.b16 %v780
        %v833 = vunpack.c.l.b16 %v781
        %v834 = vunpack.c.l.b16 %v782
        %v835 = vunpack.c.l.b16 %v783
        %v836 = vunpack.c.l.b16 %v784
        %v837 = vunpack.c.l.b16 %v785
        %v838 = vunpack.c.l.b16 %v786
        %v839 = vunpack.c.l.b16 %v787
        %v840 = vunpack.c.l.b16 %v788
        %v841 = vunpack.c.l.b16 %v789
        %v842 = vunpack.c.l.b16 %v790
        %v843 = vunpack.c.l.b16 %v791
        %v844 = vpack.c.b16 %v829, %v828
        %v845 = vpack.c.b16 %v831, %v830
        %v846 = vpack.c.b16 %v833, %v832
        %v847 = vpack.c.b16 %v835, %v834
        %v848 = vpack.c.b16 %v837, %v836
        %v849 = vpack.c.b16 %v839, %v838
        %v850 = vpack.c.b16 %v841, %v840
        %v851 = vpack.c.b16 %v843, %v842
        %v876 = vunpack.c.l.b16 %v792
        %v877 = vunpack.c.l.b16 %v793
        %v878 = vunpack.c.l.b16 %v794
        %v879 = vunpack.c.l.b16 %v795
        %v880 = vunpack.c.l.b16 %v796
        %v881 = vunpack.c.l.b16 %v797
        %v882 = vunpack.c.l.b16 %v798
        %v883 = vunpack.c.l.b16 %v799
        %v884 = vunpack.c.l.b16 %v800
        %v885 = vunpack.c.l.b16 %v801
        %v886 = vunpack.c.l.b16 %v802
        %v887 = vunpack.c.l.b16 %v803
        %v888 = vunpack.c.l.b16 %v804
        %v889 = vunpack.c.l.b16 %v805
        %v890 = vunpack.c.l.b16 %v806
        %v891 = vunpack.c.l.b16 %v807
        %v892 = vpack.c.b16 %v877, %v876
        %v893 = vpack.c.b16 %v879, %v878
        %v894 = vpack.c.b16 %v881, %v880
        %v895 = vpack.c.b16 %v883, %v882
        %v896 = vpack.c.b16 %v885, %v884
        %v897 = vpack.c.b16 %v887, %v886
        %v898 = vpack.c.b16 %v889, %v888
        %v899 = vpack.c.b16 %v891, %v890
        %908 = vmatpush.bf16.msra.mxu0 %v899
        %909 = vmatpush.bf16.msra.mxu0 %v898
        %910 = vmatpush.bf16.msra.mxu0 %v897
        %911 = vmatpush.bf16.msra.mxu0 %v896
        %912 = vmatpush.bf16.msra.mxu0 %v895
        %913 = vmatpush.bf16.msra.mxu0 %v894
        %914 = vmatpush.bf16.msra.mxu0 %v893
        %915 = vmatpush.bf16.msra.mxu0 %v892
        %916 = vmatmul.bf16.gmra.mxu0 %v844
        %v917 = vpop.f32.mrf.mxu0
        %v918 = vadd.f32 %v810, %v917
        %v919 = vpop.f32.mrf.mxu0
        %v920 = vadd.f32 %v810, %v919
        %921 = vmatmul.bf16.gmra.mxu0 %v845
        %v922 = vpop.f32.mrf.mxu0
        %v923 = vadd.f32 %v810, %v922
        %v924 = vpop.f32.mrf.mxu0
        %v925 = vadd.f32 %v810, %v924
        %926 = vmatmul.bf16.gmra.mxu0 %v846
        %v927 = vpop.f32.mrf.mxu0
        %v928 = vadd.f32 %v810, %v927
        %v929 = vpop.f32.mrf.mxu0
        %v930 = vadd.f32 %v810, %v929
        %931 = vmatmul.bf16.gmra.mxu0 %v847
        %v932 = vpop.f32.mrf.mxu0
        %v933 = vadd.f32 %v810, %v932
        %v934 = vpop.f32.mrf.mxu0
        %v935 = vadd.f32 %v810, %v934
        %936 = vmatmul.bf16.gmra.mxu0 %v848
        %v937 = vpop.f32.mrf.mxu0
        %v938 = vadd.f32 %v810, %v937
        %v939 = vpop.f32.mrf.mxu0
        %v940 = vadd.f32 %v810, %v939
        %941 = vmatmul.bf16.gmra.mxu0 %v849
        %v942 = vpop.f32.mrf.mxu0
        %v943 = vadd.f32 %v810, %v942
        %v944 = vpop.f32.mrf.mxu0
        %v945 = vadd.f32 %v810, %v944
        %946 = vmatmul.bf16.gmra.mxu0 %v850
        %v947 = vpop.f32.mrf.mxu0
        %v948 = vadd.f32 %v810, %v947
        %v949 = vpop.f32.mrf.mxu0
        %v950 = vadd.f32 %v810, %v949
        %951 = vmatmul.bf16.gmra.mxu0 %v851
        %v952 = vpop.f32.mrf.mxu0
        %v953 = vadd.f32 %v810, %v952
        %v954 = vpop.f32.mrf.mxu0
        %v955 = vadd.f32 %v810, %v954
        %956 = vdwg.mxu0
        %v957 = vmax.f32 %v918, 0.0
        %v958 = vmax.f32 %v920, 0.0
        %v959 = vmax.f32 %v923, 0.0
        %v960 = vmax.f32 %v925, 0.0
        %v961 = vmax.f32 %v928, 0.0
        %v962 = vmax.f32 %v930, 0.0
        %v963 = vmax.f32 %v933, 0.0
        %v964 = vmax.f32 %v935, 0.0
        %v965 = vmax.f32 %v938, 0.0
        %v966 = vmax.f32 %v940, 0.0
        %v967 = vmax.f32 %v943, 0.0
        %v968 = vmax.f32 %v945, 0.0
        %v969 = vmax.f32 %v948, 0.0
        %v970 = vmax.f32 %v950, 0.0
        %v971 = vmax.f32 %v953, 0.0
        %v972 = vmax.f32 %v955, 0.0
        %s973 = smul.u32 %s30, 128
        %v974 = vlaneseq
        %v975 = vshrl.u32 %v974, 7
        %v976 = vadd.s32 %v975, 8
        %v977 = vadd.s32 %v975, 16
        %v978 = vadd.s32 %v975, 24
        %v979 = vadd.s32 %v975, 32
        %v980 = vadd.s32 %v975, 40
        %v981 = vadd.s32 %v975, 48
        %v982 = vadd.s32 %v975, 56
        %v983 = vadd.s32 %v975, 64
        %v984 = vadd.s32 %v975, 72
        %v985 = vadd.s32 %v975, 80
        %v986 = vadd.s32 %v975, 88
        %v987 = vadd.s32 %v975, 96
        %v988 = vadd.s32 %v975, 104
        %v989 = vadd.s32 %v975, 112
        %v990 = vadd.s32 %v975, 120
        %v991 = vstv %s973
        %v992 = vadd.s32 %v991, %v975
        %v993 = vadd.s32 %v991, %v976
        %v994 = vadd.s32 %v991, %v977
        %v995 = vadd.s32 %v991, %v978
        %v996 = vadd.s32 %v991, %v979
        %v997 = vadd.s32 %v991, %v980
        %v998 = vadd.s32 %v991, %v981
        %v999 = vadd.s32 %v991, %v982
        %v1000 = vadd.s32 %v991, %v983
        %v1001 = vadd.s32 %v991, %v984
        %v1002 = vadd.s32 %v991, %v985
        %v1003 = vadd.s32 %v991, %v986
        %v1004 = vadd.s32 %v991, %v987
        %v1005 = vadd.s32 %v991, %v988
        %v1006 = vadd.s32 %v991, %v989
        %v1007 = vadd.s32 %v991, %v990
        %vm1008 = vcmp.lt.s32.totalorder %v992, 16
        %vm1009 = vcmp.lt.s32.totalorder %v993, 16
        %vm1010 = vcmp.lt.s32.totalorder %v994, 16
        %vm1011 = vcmp.lt.s32.totalorder %v995, 16
        %vm1012 = vcmp.lt.s32.totalorder %v996, 16
        %vm1013 = vcmp.lt.s32.totalorder %v997, 16
        %vm1014 = vcmp.lt.s32.totalorder %v998, 16
        %vm1015 = vcmp.lt.s32.totalorder %v999, 16
        %vm1016 = vcmp.lt.s32.totalorder %v1000, 16
        %vm1017 = vcmp.lt.s32.totalorder %v1001, 16
        %vm1018 = vcmp.lt.s32.totalorder %v1002, 16
        %vm1019 = vcmp.lt.s32.totalorder %v1003, 16
        %vm1020 = vcmp.lt.s32.totalorder %v1004, 16
        %vm1021 = vcmp.lt.s32.totalorder %v1005, 16
        %vm1022 = vcmp.lt.s32.totalorder %v1006, 16
        %vm1023 = vcmp.lt.s32.totalorder %v1007, 16
        %v1024 = vsel %vm1008, 1, 0
        %v1025 = vsel %vm1009, 1, 0
        %v1026 = vsel %vm1010, 1, 0
        %v1027 = vsel %vm1011, 1, 0
        %v1028 = vsel %vm1012, 1, 0
        %v1029 = vsel %vm1013, 1, 0
        %v1030 = vsel %vm1014, 1, 0
        %v1031 = vsel %vm1015, 1, 0
        %v1032 = vsel %vm1016, 1, 0
        %v1033 = vsel %vm1017, 1, 0
        %v1034 = vsel %vm1018, 1, 0
        %v1035 = vsel %vm1019, 1, 0
        %v1036 = vsel %vm1020, 1, 0
        %v1037 = vsel %vm1021, 1, 0
        %v1038 = vsel %vm1022, 1, 0
        %v1039 = vsel %vm1023, 1, 0
        %vm1040 = vcmp.eq.s32.totalorder %v1024, 1
        %vm1041 = vcmp.eq.s32.totalorder %v1025, 1
        %vm1042 = vcmp.eq.s32.totalorder %v1026, 1
        %vm1043 = vcmp.eq.s32.totalorder %v1027, 1
        %vm1044 = vcmp.eq.s32.totalorder %v1028, 1
        %vm1045 = vcmp.eq.s32.totalorder %v1029, 1
        %vm1046 = vcmp.eq.s32.totalorder %v1030, 1
        %vm1047 = vcmp.eq.s32.totalorder %v1031, 1
        %vm1048 = vcmp.eq.s32.totalorder %v1032, 1
        %vm1049 = vcmp.eq.s32.totalorder %v1033, 1
        %vm1050 = vcmp.eq.s32.totalorder %v1034, 1
        %vm1051 = vcmp.eq.s32.totalorder %v1035, 1
        %vm1052 = vcmp.eq.s32.totalorder %v1036, 1
        %vm1053 = vcmp.eq.s32.totalorder %v1037, 1
        %vm1054 = vcmp.eq.s32.totalorder %v1038, 1
        %vm1055 = vcmp.eq.s32.totalorder %v1039, 1
        %v1056 = vsel %vm1040, %v957, 0.0
        %v1057 = vsel %vm1041, %v958, 0.0
        %v1058 = vsel %vm1042, %v959, 0.0
        %v1059 = vsel %vm1043, %v960, 0.0
        %v1060 = vsel %vm1044, %v961, 0.0
        %v1061 = vsel %vm1045, %v962, 0.0
        %v1062 = vsel %vm1046, %v963, 0.0
        %v1063 = vsel %vm1047, %v964, 0.0
        %v1064 = vsel %vm1048, %v965, 0.0
        %v1065 = vsel %vm1049, %v966, 0.0
        %v1066 = vsel %vm1050, %v967, 0.0
        %v1067 = vsel %vm1051, %v968, 0.0
        %v1068 = vsel %vm1052, %v969, 0.0
        %v1069 = vsel %vm1053, %v970, 0.0
        %v1070 = vsel %vm1054, %v971, 0.0
        %v1071 = vsel %vm1055, %v972, 0.0
        %v1072 = vpack.c.bf16 %v1056, %v1056
        %v1073 = vpack.c.bf16 %v1057, %v1057
        %v1074 = vpack.c.bf16 %v1058, %v1058
        %v1075 = vpack.c.bf16 %v1059, %v1059
        %v1076 = vpack.c.bf16 %v1060, %v1060
        %v1077 = vpack.c.bf16 %v1061, %v1061
        %v1078 = vpack.c.bf16 %v1062, %v1062
        %v1079 = vpack.c.bf16 %v1063, %v1063
        %v1080 = vpack.c.bf16 %v1064, %v1064
        %v1081 = vpack.c.bf16 %v1065, %v1065
        %v1082 = vpack.c.bf16 %v1066, %v1066
        %v1083 = vpack.c.bf16 %v1067, %v1067
        %v1084 = vpack.c.bf16 %v1068, %v1068
        %v1085 = vpack.c.bf16 %v1069, %v1069
        %v1086 = vpack.c.bf16 %v1070, %v1070
        %v1087 = vpack.c.bf16 %v1071, %v1071
        %s1088 = sshra.s32 %s973, 3
        %s1089 = sand.u32 %s973, 7
        %s1090 = smul.addr %s1088, 4
        %s1091 = scalar_lea.vmem [#allocation2], %s1090
        %1092 = vst [vmem:[%s1091] sm:$0xf] %v1072
        %1093 = vst [vmem:[%s1091 + $0x4] sm:$0xf] %v1073
        %1094 = vst [vmem:[%s1091 + $0x8] sm:$0xf] %v1074
        %1095 = vst [vmem:[%s1091 + $0xc] sm:$0xf] %v1075
        %1096 = vst [vmem:[%s1091 + $0x10] sm:$0xf] %v1076
        %1097 = vst [vmem:[%s1091 + $0x14] sm:$0xf] %v1077
        %1098 = vst [vmem:[%s1091 + $0x18] sm:$0xf] %v1078
        %1099 = vst [vmem:[%s1091 + $0x1c] sm:$0xf] %v1079
        %1100 = vst [vmem:[%s1091 + $0x20] sm:$0xf] %v1080
        %1101 = vst [vmem:[%s1091 + $0x24] sm:$0xf] %v1081
        %1102 = vst [vmem:[%s1091 + $0x28] sm:$0xf] %v1082
        %1103 = vst [vmem:[%s1091 + $0x2c] sm:$0xf] %v1083
        %1104 = vst [vmem:[%s1091 + $0x30] sm:$0xf] %v1084
        %1105 = vst [vmem:[%s1091 + $0x34] sm:$0xf] %v1085
        %1106 = vst [vmem:[%s1091 + $0x38] sm:$0xf] %v1086
        %1107 = vst [vmem:[%s1091 + $0x3c] sm:$0xf] %v1087
        %v1108 = vld [vmem:[#allocation4] sm:$0x1]
        %v1109 = vadd.f32 %v1056, %v1057
        %v1110 = vadd.f32 %v1109, %v1058
        %v1111 = vadd.f32 %v1110, %v1059
        %v1112 = vadd.f32 %v1111, %v1060
        %v1113 = vadd.f32 %v1112, %v1061
        %v1114 = vadd.f32 %v1113, %v1062
        %v1115 = vadd.f32 %v1114, %v1063
        %v1116 = vadd.f32 %v1115, %v1064
        %v1117 = vadd.f32 %v1116, %v1065
        %v1118 = vadd.f32 %v1117, %v1066
        %v1119 = vadd.f32 %v1118, %v1067
        %v1120 = vadd.f32 %v1119, %v1068
        %v1121 = vadd.f32 %v1120, %v1069
        %v1122 = vadd.f32 %v1121, %v1070
        %v1123 = vadd.f32 %v1122, %v1071
        %v1124 = vrot.slane %v1123, 4
        %v1125 = vadd.f32 %v1123, %v1124
        %v1126 = vrot.slane %v1125, 2
        %v1127 = vadd.f32 %v1125, %v1126
        %v1128 = vrot.slane %v1127, 1
        %v1129 = vadd.f32 %v1127, %v1128
        %v1130 = vadd.f32 %v1108, %v1129
        %1131 = vst [vmem:[#allocation4] sm:$0x1] %v1130
        // Predicated region
        $region97: #{tpu_custom_call.1} parent=59 // pred_check
          %p1132 = pneg %p525
        $region98: #{tpu_custom_call.1} parent=59 // pred_check_branch
          %1134 = sbr.rel (%p1132) target = $region100
        $region99: #{tpu_custom_call.1} parent=59 // pred_region
          %v1135 = vld [vmem:[#allocation5] sm:$0x1]
          %v1136 = vld [vmem:[#allocation4] sm:$0x1]
          %v1137 = vld [vmem:[%s471] sm:$0xff]
          %v1138 = vld [vmem:[%s471 + $0x8] sm:$0xff]
          %v1139 = vld [vmem:[%s471 + $0x10] sm:$0xff]
          %v1140 = vld [vmem:[%s471 + $0x18] sm:$0xff]
          %v1141 = vld [vmem:[%s471 + $0x20] sm:$0xff]
          %v1142 = vld [vmem:[%s471 + $0x28] sm:$0xff]
          %v1143 = vld [vmem:[%s471 + $0x30] sm:$0xff]
          %v1144 = vld [vmem:[%s471 + $0x38] sm:$0xff]
          %v1145 = vld [vmem:[%s471 + $0x40] sm:$0xff]
          %v1146 = vld [vmem:[%s471 + $0x48] sm:$0xff]
          %v1147 = vld [vmem:[%s471 + $0x50] sm:$0xff]
          %v1148 = vld [vmem:[%s471 + $0x58] sm:$0xff]
          %v1149 = vld [vmem:[%s471 + $0x60] sm:$0xff]
          %v1150 = vld [vmem:[%s471 + $0x68] sm:$0xff]
          %v1151 = vld [vmem:[%s471 + $0x70] sm:$0xff]
          %v1152 = vld [vmem:[%s471 + $0x78] sm:$0xff]
          %1153 = vmatpush.msra.mxu0 %v1152
          %1154 = vmatpush.msra.mxu0 %v1151
          %1155 = vmatpush.msra.mxu0 %v1150
          %1156 = vmatpush.msra.mxu0 %v1149
          %1157 = vmatpush.msra.mxu0 %v1148
          %1158 = vmatpush.msra.mxu0 %v1147
          %1159 = vmatpush.msra.mxu0 %v1146
          %1160 = vmatpush.msra.mxu0 %v1145
          %1161 = vmatpush.msra.mxu0 %v1144
          %1162 = vmatpush.msra.mxu0 %v1143
          %1163 = vmatpush.msra.mxu0 %v1142
          %1164 = vmatpush.msra.mxu0 %v1141
          %1165 = vmatpush.msra.mxu0 %v1140
          %1166 = vmatpush.msra.mxu0 %v1139
          %1167 = vmatpush.msra.mxu0 %v1138
          %1168 = vmatpush.msra.mxu0 %v1137
          %1169 = vmatmul.f32.gmra.mxu0 %v1136
          %v1170 = vpop.f32.mrf.mxu0
          %v1171 = vadd.f32 0.0, %v1170
          %1172 = vdwg.mxu0
          %v1173 = vadd.f32 %v1135, %v1171
          %1174 = vst [vmem:[#allocation5] sm:$0x1] %v1173
        $region100: #{tpu_custom_call.1} parent=59 // pred_fallthru
          _
        %p1175 = scmp.eq.s32.totalorder %s29, 2
        %p1176 = pnand %p1175, %p525
        %p1177 = pneg %p1176
        // Predicated region
        $region101: #{tpu_custom_call.1} parent=59 // pred_check
          _
        $region102: #{tpu_custom_call.1} parent=59 // pred_check_branch
          %1179 = sbr.rel (%p1176) target = $region104
        $region103: #{tpu_custom_call.1} parent=59 // pred_region
          %v1180 = vld [vmem:[#allocation5] sm:$0x1]
          %v1181 = vld [vmem:[%s5] sm:$0x1]
          %v1182 = vadd.f32 %v1180, %v1181
          %v1183 = vmax.f32 %v1182, 0.0
          %v1184 = vld [vmem:[#allocation14] sm:$0xff]
          %v1185 = vld [vmem:[#allocation14 + $0x8] sm:$0xff]
          %v1186 = vld [vmem:[#allocation14 + $0x10] sm:$0xff]
          %v1187 = vld [vmem:[#allocation14 + $0x18] sm:$0xff]
          %v1188 = vld [vmem:[#allocation14 + $0x20] sm:$0xff]
          %v1189 = vld [vmem:[#allocation14 + $0x28] sm:$0xff]
          %v1190 = vld [vmem:[#allocation14 + $0x30] sm:$0xff]
          %v1191 = vld [vmem:[#allocation14 + $0x38] sm:$0xff]
          %v1192 = vld [vmem:[#allocation14 + $0x40] sm:$0xff]
          %v1193 = vld [vmem:[#allocation14 + $0x48] sm:$0xff]
          %v1194 = vld [vmem:[#allocation14 + $0x50] sm:$0xff]
          %v1195 = vld [vmem:[#allocation14 + $0x58] sm:$0xff]
          %v1196 = vld [vmem:[#allocation14 + $0x60] sm:$0xff]
          %v1197 = vld [vmem:[#allocation14 + $0x68] sm:$0xff]
          %v1198 = vld [vmem:[#allocation14 + $0x70] sm:$0xff]
          %v1199 = vld [vmem:[#allocation14 + $0x78] sm:$0xff]
          %v1200 = vld [vmem:[%s7] sm:$0x1]
          %1201 = vmatpush.msra.mxu0 %v1199
          %1202 = vmatpush.msra.mxu0 %v1198
          %1203 = vmatpush.msra.mxu0 %v1197
          %1204 = vmatpush.msra.mxu0 %v1196
          %1205 = vmatpush.msra.mxu0 %v1195
          %1206 = vmatpush.msra.mxu0 %v1194
          %1207 = vmatpush.msra.mxu0 %v1193
          %1208 = vmatpush.msra.mxu0 %v1192
          %1209 = vmatpush.msra.mxu0 %v1191
          %1210 = vmatpush.msra.mxu0 %v1190
          %1211 = vmatpush.msra.mxu0 %v1189
          %1212 = vmatpush.msra.mxu0 %v1188
          %1213 = vmatpush.msra.mxu0 %v1187
          %1214 = vmatpush.msra.mxu0 %v1186
          %1215 = vmatpush.msra.mxu0 %v1185
          %1216 = vmatpush.msra.mxu0 %v1184
          %1217 = vmatmul.f32.gmra.mxu0 %v1183
          %v1218 = vpop.f32.mrf.mxu0
          %v1219 = vadd.f32 %v1200, %v1218
          %1220 = vdwg.mxu0
          %v1221 = vmax.f32 %v1219, 0.0
          %v1222 = vld [vmem:[#allocation15] sm:$0xff]
          %v1223 = vld [vmem:[#allocation15 + $0x8] sm:$0xff]
          %v1224 = vld [vmem:[#allocation15 + $0x10] sm:$0xff]
          %v1225 = vld [vmem:[#allocation15 + $0x18] sm:$0xff]
          %v1226 = vld [vmem:[#allocation15 + $0x20] sm:$0xff]
          %v1227 = vld [vmem:[#allocation15 + $0x28] sm:$0xff]
          %v1228 = vld [vmem:[#allocation15 + $0x30] sm:$0xff]
          %v1229 = vld [vmem:[#allocation15 + $0x38] sm:$0xff]
          %v1230 = vld [vmem:[#allocation15 + $0x40] sm:$0xff]
          %v1231 = vld [vmem:[#allocation15 + $0x48] sm:$0xff]
          %v1232 = vld [vmem:[#allocation15 + $0x50] sm:$0xff]
          %v1233 = vld [vmem:[#allocation15 + $0x58] sm:$0xff]
          %v1234 = vld [vmem:[#allocation15 + $0x60] sm:$0xff]
          %v1235 = vld [vmem:[#allocation15 + $0x68] sm:$0xff]
          %v1236 = vld [vmem:[#allocation15 + $0x70] sm:$0xff]
          %v1237 = vld [vmem:[#allocation15 + $0x78] sm:$0xff]
          %v1238 = vld [vmem:[%s9] sm:$0x1]
          %1239 = vmatpush.msra.mxu0 %v1237
          %1240 = vmatpush.msra.mxu0 %v1236
          %1241 = vmatpush.msra.mxu0 %v1235
          %1242 = vmatpush.msra.mxu0 %v1234
          %1243 = vmatpush.msra.mxu0 %v1233
          %1244 = vmatpush.msra.mxu0 %v1232
          %1245 = vmatpush.msra.mxu0 %v1231
          %1246 = vmatpush.msra.mxu0 %v1230
          %1247 = vmatpush.msra.mxu0 %v1229
          %1248 = vmatpush.msra.mxu0 %v1228
          %1249 = vmatpush.msra.mxu0 %v1227
          %1250 = vmatpush.msra.mxu0 %v1226
          %1251 = vmatpush.msra.mxu0 %v1225
          %1252 = vmatpush.msra.mxu0 %v1224
          %1253 = vmatpush.msra.mxu0 %v1223
          %1254 = vmatpush.msra.mxu0 %v1222
          %1255 = vmatmul.f32.gmra.mxu0 %v1221
          %v1256 = vpop.f32.mrf.mxu0
          %v1257 = vadd.f32 %v1238, %v1256
          %1258 = vdwg.mxu0
          %1259 = vst [vmem:[#allocation17] sm:$0x1] %v1257
        $region104: #{tpu_custom_call.1} parent=59 // pred_fallthru
          _
        // Predicated region
        $region105: #{tpu_custom_call.1} parent=59 // pred_check
          %p1260 = pneg %p280
        $region106: #{tpu_custom_call.1} parent=59 // pred_check_branch
          %1262 = sbr.rel (%p1260) target = $region108
        $region107: #{tpu_custom_call.1} parent=59 // pred_region
          %1264 = vsyncadd [#allocation8], 0
          %s1266 = sshll.u32 [#allocation17], 4
          %s1267 = int_to_ptr.vmem [resolvable:$true] %s1266
          %s1268 = sshll.u32 %s10, 4
          %s1269 = int_to_ptr.hbm [resolvable:$true] %s1268
          %1271 = dma.vmem_to_hbm [thread:$0]  %s1267, 16, %s1269, [#allocation8]
        $region108: #{tpu_custom_call.1} parent=59 // pred_fallthru
          _
        // Predicated region
        $region109: #{tpu_custom_call.1} parent=59 // pred_check
          %p1272 = pneg %p280
        $region110: #{tpu_custom_call.1} parent=59 // pred_check_branch
          %1274 = sbr.rel (%p1272) target = $region112
        $region111: #{tpu_custom_call.1} parent=59 // pred_region
          %1276 = dma.done [#allocation8], 16
        $region112: #{tpu_custom_call.1} parent=59 // pred_fallthru
          _
      $region60: #{tpu_custom_call.1} parent=5 // pred_fallthru
        _
      %p1277 = scmp.le.s32.totalorder 2, %s20
      // Predicated region
      $region113: #{tpu_custom_call.1} parent=5 // pred_check
        %p1278 = pneg %p1277
      $region114: #{tpu_custom_call.1} parent=5 // pred_check_branch
        %1280 = sbr.rel (%p1278) target = $region116
      $region115: #{tpu_custom_call.1} parent=5 // pred_region
        %s1281 = ssub.s32 %s20, 2
      $region116: #{tpu_custom_call.1} parent=5 // pred_fallthru
        _
    $region6: #{tpu_custom_call.1} parent=1 // loop_footer
      %s24 = sadd.s32 1, %s20
    $region7: #{tpu_custom_call.1} parent=1 // loop_footer_branch
      %19 = sbr.rel target = $region3
    $region8: #{tpu_custom_call.1} parent=1 // loop_exit
      _
    %1282 = vsyncpa [#allocation7], 1
    %s1283 = scalar_lea.sflag [#allocation7], 1
    %1284 = vsyncpa %s1283, 1
    %1285 = vsyncpa [#allocation10], 1
    %1286 = vsyncpa [#allocation16], 1
    %1287 = vsyncpa [#allocation8], 1
    %s1288 = scalar_lea.sflag [#allocation8], 1
    %1289 = vsyncpa %s1288, 1

</llo_original>
